<compile_context>
chip_gen: v7x
topology: tpu7x:2x2x1
jax: 0.10.0
libtpu: 0.0.40
codegen_flags: <defaults>
</compile_context>

<pallas_src>
import functools

import jax
import jax.numpy as jnp
from jax.experimental import pallas as pl
from jax.experimental.pallas import tpu as pltpu

# ---- model hyperparameters (match the PyTorch module defaults) ----
HID_LAYERS = 3
EMB_DIM = 64
FFN_DIM = 4 * EMB_DIM   # 256
LANE = 128              # TPU lane width; feature dims are zero-padded to this


def _round_up(n, m):
    return ((n + m - 1) // m) * m


def _detect_tpu_generation():
    try:
        kind = jax.devices()[0].device_kind.lower()
    except Exception:
        return "unknown"
    if "v7" in kind:
        return "v7x"
    if "v6" in kind:
        return "v6e"
    if "v5e" in kind or "v5 lite" in kind or "v5lite" in kind:
        return "v5e"
    return "other"


TPU_GEN = _detect_tpu_generation()
# bf16 VALUs exist on v6e/v7x -> bf16 elementwise there; keep f32 elsewhere (v5e
# has no bf16 VALU and its f32 VPU work hides under the MXU anyway).
COMPUTE_DTYPE = jnp.bfloat16 if TPU_GEN in ("v6e", "v7x") else jnp.float32
# Largest batch tile per generation (v7x has only 64 MiB VMEM).
_MAX_TILE = {"v7x": 2048, "v6e": 4096, "v5e": 4096}.get(TPU_GEN, 2048)


# --------------------------------------------------------------------------
# Kernel
# --------------------------------------------------------------------------
def _qnet_kernel(x_ref,
                 we_ref, be_ref,               # obs_embedding
                 nn1w_ref, nn1b_ref,           # HiddenLayer.nn1   (stacked over layers)
                 f1w_ref, f1b_ref,             # HiddenLayer.ffn[0]
                 f2w_ref, f2b_ref,             # HiddenLayer.ffn[2]
                 fw1_ref, fb1_ref,             # head ffn[0]
                 fw2_ref, fb2_ref,             # head ffn[2]
                 o_ref, *, cdt):
    # x arrives in its HBM dtype (f32); cast to bf16 for the MXU here (in-kernel,
    # so the wrapper never re-materializes x).
    x = x_ref[...].astype(jnp.bfloat16)

    # obs_embedding: Linear(obs_size, emb_dim)  (emb zero-padded to 128 lanes)
    h = jnp.dot(x, we_ref[...], preferred_element_type=jnp.float32).astype(cdt) \
        + be_ref[...]

    # residual HiddenLayer blocks (short fixed loop -> unrolled at trace time)
    for i in range(HID_LAYERS):
        # out1 = nn1(x); x = x + relu(out1)
        out1 = jnp.dot(h.astype(jnp.bfloat16), nn1w_ref[i],
                       preferred_element_type=jnp.float32).astype(cdt) + nn1b_ref[i]
        h = h + jnp.maximum(out1, 0)
        # ffn = Linear -> ReLU -> Linear ; x = x + relu(ffn)
        f1 = jnp.maximum(
            jnp.dot(h.astype(jnp.bfloat16), f1w_ref[i],
                    preferred_element_type=jnp.float32).astype(cdt) + f1b_ref[i],
            0)
        f2 = jnp.dot(f1.astype(jnp.bfloat16), f2w_ref[i],
                     preferred_element_type=jnp.float32).astype(cdt) + f2b_ref[i]
        h = h + jnp.maximum(f2, 0)

    # head: Linear -> ReLU -> Linear(action_size, padded to 128 lanes)
    y = jnp.maximum(
        jnp.dot(h.astype(jnp.bfloat16), fw1_ref[...],
                preferred_element_type=jnp.float32).astype(cdt) + fb1_ref[...],
        0)
    o_ref[...] = (jnp.dot(y.astype(jnp.bfloat16), fw2_ref[...],
                          preferred_element_type=jnp.float32).astype(cdt)
                  + fb2_ref[...]).astype(o_ref.dtype)


# --------------------------------------------------------------------------
# Parameters
# --------------------------------------------------------------------------
def init_params(key, obs_size, action_size, emb_dim=EMB_DIM, ffn_dim=FFN_DIM,
                hid_layers=HID_LAYERS):
    """PyTorch-Linear-style init (uniform +/- 1/sqrt(fan_in)).
    Weights stored as [in, out] (transposed relative to torch): y = x @ W + b."""
    keys = iter(jax.random.split(key, 64))

    def linear(in_f, out_f):
        bound = 1.0 / jnp.sqrt(jnp.float32(in_f))
        w = jax.random.uniform(next(keys), (in_f, out_f), jnp.float32, -bound, bound)
        b = jax.random.uniform(next(keys), (1, out_f), jnp.float32, -bound, bound)
        return w, b

    p = {}
    p["we"], p["be"] = linear(obs_size, emb_dim)

    nn1w, nn1b, f1w, f1b, f2w, f2b = [], [], [], [], [], []
    for _ in range(hid_layers):
        w, b = linear(emb_dim, emb_dim); nn1w.append(w); nn1b.append(b)
        w, b = linear(emb_dim, ffn_dim); f1w.append(w); f1b.append(b)
        w, b = linear(ffn_dim, emb_dim); f2w.append(w); f2b.append(b)
    p["h_nn1w"] = jnp.stack(nn1w); p["h_nn1b"] = jnp.stack(nn1b)
    p["h_f1w"] = jnp.stack(f1w);   p["h_f1b"] = jnp.stack(f1b)
    p["h_f2w"] = jnp.stack(f2w);   p["h_f2b"] = jnp.stack(f2b)

    p["fw1"], p["fb1"] = linear(emb_dim, emb_dim)
    p["fw2"], p["fb2"] = linear(emb_dim, action_size)
    return p


def _pad_to(a, shape):
    """Zero-pad trailing edges of `a` up to `shape`."""
    pads = [(0, s - d) for d, s in zip(a.shape, shape)]
    return jnp.pad(a, pads)


def prepare_params(p, compute_dtype=COMPUTE_DTYPE):
    """One-time prep (call ONCE, not per forward): pad feature dims to the
    128-lane width, matmul weights -> bf16, biases -> the elementwise compute
    dtype. Zero padding keeps padded lanes exactly 0 through every bias add,
    ReLU and residual, so un-padded columns are numerically unchanged."""
    obs_size = p["we"].shape[0]
    E, F = LANE, FFN_DIM   # padded emb = 128, ffn = 256 (already lane-dense)
    q = {}
    q["we"] = _pad_to(p["we"], (obs_size, E)).astype(jnp.bfloat16)
    q["be"] = _pad_to(p["be"], (1, E)).astype(compute_dtype)
    q["h_nn1w"] = _pad_to(p["h_nn1w"], (HID_LAYERS, E, E)).astype(jnp.bfloat16)
    q["h_nn1b"] = _pad_to(p["h_nn1b"], (HID_LAYERS, 1, E)).astype(compute_dtype)
    q["h_f1w"] = _pad_to(p["h_f1w"], (HID_LAYERS, E, F)).astype(jnp.bfloat16)
    q["h_f1b"] = _pad_to(p["h_f1b"], (HID_LAYERS, 1, F)).astype(compute_dtype)
    q["h_f2w"] = _pad_to(p["h_f2w"], (HID_LAYERS, F, E)).astype(jnp.bfloat16)
    q["h_f2b"] = _pad_to(p["h_f2b"], (HID_LAYERS, 1, E)).astype(compute_dtype)
    q["fw1"] = _pad_to(p["fw1"], (E, E)).astype(jnp.bfloat16)
    q["fb1"] = _pad_to(p["fb1"], (1, E)).astype(compute_dtype)
    q["fw2"] = _pad_to(p["fw2"], (E, LANE)).astype(jnp.bfloat16)
    q["fb2"] = _pad_to(p["fb2"], (1, LANE)).astype(compute_dtype)
    return q


# --------------------------------------------------------------------------
# Forward
# --------------------------------------------------------------------------
def _choose_tile(batch, tile_b=None):
    max_tile = tile_b if tile_b is not None else _MAX_TILE
    # minimum number of grid steps covering the batch at <= max_tile rows each
    steps = max(1, -(-batch // max_tile))
    if TPU_GEN == "v7x" and batch >= 32:
        steps = max(steps, 2)   # grid >= 2 so both v7x TensorCores get work
    # balance tiles across steps to minimize padding waste; 16-row alignment
    # keeps bf16 sublane packing happy.
    return _round_up(-(-batch // steps), 16)


@functools.partial(jax.jit, static_argnames=("action_size", "tile_b"))
def qnetwork_forward(x, prepared_params, action_size, tile_b=None):
    """x: [B, *obs_dims], prepared_params from prepare_params() -> [B, action_size] f32."""
    p = prepared_params
    cdt = jnp.dtype(p["be"].dtype)          # elementwise compute dtype (bf16 / f32)

    B = x.shape[0]
    x2d = x.reshape(B, -1)                  # no wrapper-side cast; bf16 cast is in-kernel
    obs_size = x2d.shape[1]

    tb = _choose_tile(B, tile_b)
    b_pad = _round_up(B, tb)
    if b_pad != B:                          # pad only when actually needed
        x2d = jnp.pad(x2d, ((0, b_pad - B), (0, 0)))
    grid = (b_pad // tb,)

    weight_order = ("we", "be", "h_nn1w", "h_nn1b", "h_f1w", "h_f1b",
                    "h_f2w", "h_f2b", "fw1", "fb1", "fw2", "fb2")
    weight_args = tuple(p[k] for k in weight_order)

    def resident(arr):
        nd = arr.ndim
        # constant index_map: DMA'd once, stays VMEM-resident across grid steps
        return pl.BlockSpec(arr.shape, lambda i, nd=nd: (0,) * nd)

    in_specs = [pl.BlockSpec((tb, obs_size), lambda i: (i, 0))] + \
               [resident(a) for a in weight_args]
    out_spec = pl.BlockSpec((tb, LANE), lambda i: (i, 0))

    # Explicit scoped-VMEM budget (defaults: 16 MiB v5e / 32 MiB v6e-v7x):
    #   double-buffered input tile + double-buffered output tile
    #   + resident weights (x2 for pipeline copies) + generous room for the
    #   live [tb, 256]-class intermediates + fixed slack for compiler scratch.
    weight_bytes = sum(a.size * a.dtype.itemsize for a in weight_args)
    vmem_limit = (2 * tb * obs_size * x2d.dtype.itemsize
                  + 2 * tb * LANE * jnp.dtype(cdt).itemsize
                  + 2 * weight_bytes
                  + 6 * tb * FFN_DIM * 4
                  + (8 << 20))
    vmem_cap = (48 << 20) if TPU_GEN == "v7x" else (100 << 20)
    vmem_limit = int(min(max(vmem_limit, 32 << 20), vmem_cap))

    out = pl.pallas_call(
        functools.partial(_qnet_kernel, cdt=cdt),
        out_shape=jax.ShapeDtypeStruct((b_pad, LANE), cdt),
        grid=grid,
        in_specs=in_specs,
        out_specs=out_spec,
        compiler_params=pltpu.CompilerParams(
            dimension_semantics=("parallel",),
            vmem_limit_bytes=vmem_limit),
    )(x2d, *weight_args)

    return out[:B, :action_size].astype(jnp.float32)


# --------------------------------------------------------------------------
# References (validation)
# --------------------------------------------------------------------------
def _reference_forward_matched(x, q, action_size):
    """Pure-JAX replica of the exact kernel dtype path (bf16 MXU operands,
    f32 accumulation, elementwise in the prepared compute dtype)."""
    cdt = q["be"].dtype
    h = x.reshape(x.shape[0], -1).astype(jnp.bfloat16)
    h = jnp.dot(h, q["we"], preferred_element_type=jnp.float32).astype(cdt) + q["be"]
    for i in range(HID_LAYERS):
        out1 = jnp.dot(h.astype(jnp.bfloat16), q["h_nn1w"][i],
                       preferred_element_type=jnp.float32).astype(cdt) + q["h_nn1b"][i]
        h = h + jnp.maximum(out1, 0)
        f1 = jnp.maximum(
            jnp.dot(h.astype(jnp.bfloat16), q["h_f1w"][i],
                    preferred_element_type=jnp.float32).astype(cdt) + q["h_f1b"][i], 0)
        f2 = jnp.dot(f1.astype(jnp.bfloat16), q["h_f2w"][i],
                     preferred_element_type=jnp.float32).astype(cdt) + q["h_f2b"][i]
        h = h + jnp.maximum(f2, 0)
    y = jnp.maximum(
        jnp.dot(h.astype(jnp.bfloat16), q["fw1"],
                preferred_element_type=jnp.float32).astype(cdt) + q["fb1"], 0)
    out = jnp.dot(y.astype(jnp.bfloat16), q["fw2"],
                  preferred_element_type=jnp.float32).astype(cdt) + q["fb2"]
    return out[:, :action_size].astype(jnp.float32)


def _reference_forward_f32(x, p):
    """Full-f32 replica of the PyTorch forward (semantic sanity check)."""
    h = x.reshape(x.shape[0], -1).astype(jnp.float32) @ p["we"] + p["be"]
    for i in range(HID_LAYERS):
        out1 = h @ p["h_nn1w"][i] + p["h_nn1b"][i]
        h = h + jnp.maximum(out1, 0.0)
        f1 = jnp.maximum(h @ p["h_f1w"][i] + p["h_f1b"][i], 0.0)
        f2 = f1 @ p["h_f2w"][i] + p["h_f2b"][i]
        h = h + jnp.maximum(f2, 0.0)
    y = jnp.maximum(h @ p["fw1"] + p["fb1"], 0.0)
    return y @ p["fw2"] + p["fb2"]


if __name__ == "__main__":
    key = jax.random.PRNGKey(0)
    k_param, k_x = jax.random.split(key)

    batch, obs_h, obs_w = 8, 4, 4          # obs_size = 16 after flatten
    action_size = 4

    x = jax.random.normal(k_x, (batch, obs_h, obs_w), jnp.float32)
    params = init_params(k_param, obs_size=obs_h * obs_w, action_size=action_size)

    prepared = prepare_params(params)       # done ONCE, outside the forward path
    out = qnetwork_forward(x, prepared, action_size)
    out = jax.block_until_ready(out)
    assert out.shape == (batch, action_size)

    ref_matched = _reference_forward_matched(x, prepared, action_size)
    ref_f32 = _reference_forward_f32(x, params)

    # Exact-path check (identical dtype pipeline as the kernel).
    assert jnp.allclose(out, ref_matched, atol=3e-2, rtol=3e-2), \
        "mismatch vs matched-dtype reference"
    # Semantic check vs full-precision PyTorch-equivalent forward.
    bf16_path = jnp.dtype(prepared["be"].dtype) == jnp.dtype(jnp.bfloat16)
    tol = 2e-1 if bf16_path else 1e-1
    assert jnp.allclose(out, ref_f32, atol=tol, rtol=tol), "mismatch vs f32 reference"

    print("KERNEL_OK")
</pallas_src>

<mosaic_0001>
module attributes {stable_mosaic.version = 11 : i64} {
  func.func @_qnet_kernel(%arg0: i32, %arg1: memref<16x16xf32, #tpu.memory_space<vmem>>, %arg2: memref<16x128xbf16, #tpu.memory_space<vmem>>, %arg3: memref<1x128xf32, #tpu.memory_space<vmem>>, %arg4: memref<3x128x128xbf16, #tpu.memory_space<vmem>>, %arg5: memref<3x1x128xf32, #tpu.memory_space<vmem>>, %arg6: memref<3x128x256xbf16, #tpu.memory_space<vmem>>, %arg7: memref<3x1x256xf32, #tpu.memory_space<vmem>>, %arg8: memref<3x256x128xbf16, #tpu.memory_space<vmem>>, %arg9: memref<3x1x128xf32, #tpu.memory_space<vmem>>, %arg10: memref<128x128xbf16, #tpu.memory_space<vmem>>, %arg11: memref<1x128xf32, #tpu.memory_space<vmem>>, %arg12: memref<128x128xbf16, #tpu.memory_space<vmem>>, %arg13: memref<1x128xf32, #tpu.memory_space<vmem>>, %arg14: memref<16x128xf32, #tpu.memory_space<vmem>>) attributes {dimension_semantics = [#tpu.dimension_semantics<parallel>], iteration_bounds = array<i64: 1>, scalar_prefetch = 0 : i64, scratch_operands = 0 : i64, tpu.core_type = #tpu.core_type<tc>, window_params = [{transform_indices = @transform_0, window_bounds = array<i64: 16, 16>}, {pipeline_mode = #tpu.pipeline_mode<synchronous>, transform_indices = @transform_1, window_bounds = array<i64: 16, 128>}, {pipeline_mode = #tpu.pipeline_mode<synchronous>, transform_indices = @transform_2, window_bounds = array<i64: 1, 128>}, {pipeline_mode = #tpu.pipeline_mode<synchronous>, transform_indices = @transform_3, window_bounds = array<i64: 3, 128, 128>}, {pipeline_mode = #tpu.pipeline_mode<synchronous>, transform_indices = @transform_4, window_bounds = array<i64: 3, 1, 128>}, {pipeline_mode = #tpu.pipeline_mode<synchronous>, transform_indices = @transform_5, window_bounds = array<i64: 3, 128, 256>}, {pipeline_mode = #tpu.pipeline_mode<synchronous>, transform_indices = @transform_6, window_bounds = array<i64: 3, 1, 256>}, {pipeline_mode = #tpu.pipeline_mode<synchronous>, transform_indices = @transform_7, window_bounds = array<i64: 3, 256, 128>}, {pipeline_mode = #tpu.pipeline_mode<synchronous>, transform_indices = @transform_8, window_bounds = array<i64: 3, 1, 128>}, {pipeline_mode = #tpu.pipeline_mode<synchronous>, transform_indices = @transform_9, window_bounds = array<i64: 128, 128>}, {pipeline_mode = #tpu.pipeline_mode<synchronous>, transform_indices = @transform_10, window_bounds = array<i64: 1, 128>}, {pipeline_mode = #tpu.pipeline_mode<synchronous>, transform_indices = @transform_11, window_bounds = array<i64: 128, 128>}, {pipeline_mode = #tpu.pipeline_mode<synchronous>, transform_indices = @transform_12, window_bounds = array<i64: 1, 128>}, {transform_indices = @transform_13, window_bounds = array<i64: 16, 128>}]} {
    %c0 = arith.constant 0 : index
    %c0_0 = arith.constant 0 : index
    %0 = vector.load %arg1[%c0, %c0_0] : memref<16x16xf32, #tpu.memory_space<vmem>>, vector<16x16xf32>
    %1 = arith.truncf %0 : vector<16x16xf32> to vector<16x16xbf16>
    %c0_1 = arith.constant 0 : index
    %c0_2 = arith.constant 0 : index
    %2 = vector.load %arg2[%c0_1, %c0_2] : memref<16x128xbf16, #tpu.memory_space<vmem>>, vector<16x128xbf16>
    %cst = arith.constant dense<0.000000e+00> : vector<16x128xf32>
    %3 = tpu.matmul %1, %2, %cst {dimension_numbers = #tpu.dot_dimension_numbers<[1], [0], [0], [1], [0, 0, 1, 1], [], []>} : vector<16x16xbf16>, vector<16x128xbf16>, vector<16x128xf32> -> vector<16x128xf32>
    %c0_3 = arith.constant 0 : index
    %c0_4 = arith.constant 0 : index
    %4 = vector.load %arg3[%c0_3, %c0_4] : memref<1x128xf32, #tpu.memory_space<vmem>>, vector<1x128xf32>
    %5 = vector.broadcast %4 : vector<1x128xf32> to vector<16x128xf32>
    %6 = arith.addf %3, %5 : vector<16x128xf32>
    %7 = arith.truncf %6 : vector<16x128xf32> to vector<16x128xbf16>
    %c0_5 = arith.constant 0 : index
    %c0_6 = arith.constant 0 : index
    %c0_7 = arith.constant 0 : index
    %8 = vector.load %arg4[%c0_5, %c0_6, %c0_7] : memref<3x128x128xbf16, #tpu.memory_space<vmem>>, vector<1x128x128xbf16>
    %9 = vector.shape_cast %8 : vector<1x128x128xbf16> to vector<128x128xbf16>
    %cst_8 = arith.constant dense<0.000000e+00> : vector<16x128xf32>
    %10 = tpu.matmul %7, %9, %cst_8 {dimension_numbers = #tpu.dot_dimension_numbers<[1], [0], [0], [1], [0, 0, 1, 1], [], []>} : vector<16x128xbf16>, vector<128x128xbf16>, vector<16x128xf32> -> vector<16x128xf32>
    %c0_9 = arith.constant 0 : index
    %c0_10 = arith.constant 0 : index
    %c0_11 = arith.constant 0 : index
    %11 = vector.load %arg5[%c0_9, %c0_10, %c0_11] : memref<3x1x128xf32, #tpu.memory_space<vmem>>, vector<1x1x128xf32>
    %12 = vector.shape_cast %11 : vector<1x1x128xf32> to vector<1x128xf32>
    %13 = vector.broadcast %12 : vector<1x128xf32> to vector<16x128xf32>
    %14 = arith.addf %10, %13 : vector<16x128xf32>
    %cst_12 = arith.constant 0.000000e+00 : f32
    %15 = vector.broadcast %cst_12 : f32 to vector<16x128xf32>
    %16 = arith.maximumf %14, %15 : vector<16x128xf32>
    %17 = arith.addf %6, %16 : vector<16x128xf32>
    %18 = arith.truncf %17 : vector<16x128xf32> to vector<16x128xbf16>
    %c0_13 = arith.constant 0 : index
    %c0_14 = arith.constant 0 : index
    %c0_15 = arith.constant 0 : index
    %19 = vector.load %arg6[%c0_13, %c0_14, %c0_15] : memref<3x128x256xbf16, #tpu.memory_space<vmem>>, vector<1x128x256xbf16>
    %20 = vector.shape_cast %19 : vector<1x128x256xbf16> to vector<128x256xbf16>
    %cst_16 = arith.constant dense<0.000000e+00> : vector<16x256xf32>
    %21 = tpu.matmul %18, %20, %cst_16 {dimension_numbers = #tpu.dot_dimension_numbers<[1], [0], [0], [1], [0, 0, 1, 1], [], []>} : vector<16x128xbf16>, vector<128x256xbf16>, vector<16x256xf32> -> vector<16x256xf32>
    %c0_17 = arith.constant 0 : index
    %c0_18 = arith.constant 0 : index
    %c0_19 = arith.constant 0 : index
    %22 = vector.load %arg7[%c0_17, %c0_18, %c0_19] : memref<3x1x256xf32, #tpu.memory_space<vmem>>, vector<1x1x256xf32>
    %23 = vector.shape_cast %22 : vector<1x1x256xf32> to vector<1x256xf32>
    %24 = vector.broadcast %23 : vector<1x256xf32> to vector<16x256xf32>
    %25 = arith.addf %21, %24 : vector<16x256xf32>
    %cst_20 = arith.constant 0.000000e+00 : f32
    %26 = vector.broadcast %cst_20 : f32 to vector<16x256xf32>
    %27 = arith.maximumf %25, %26 : vector<16x256xf32>
    %28 = arith.truncf %27 : vector<16x256xf32> to vector<16x256xbf16>
    %c0_21 = arith.constant 0 : index
    %c0_22 = arith.constant 0 : index
    %c0_23 = arith.constant 0 : index
    %29 = vector.load %arg8[%c0_21, %c0_22, %c0_23] : memref<3x256x128xbf16, #tpu.memory_space<vmem>>, vector<1x256x128xbf16>
    %30 = vector.shape_cast %29 : vector<1x256x128xbf16> to vector<256x128xbf16>
    %cst_24 = arith.constant dense<0.000000e+00> : vector<16x128xf32>
    %31 = tpu.matmul %28, %30, %cst_24 {dimension_numbers = #tpu.dot_dimension_numbers<[1], [0], [0], [1], [0, 0, 1, 1], [], []>} : vector<16x256xbf16>, vector<256x128xbf16>, vector<16x128xf32> -> vector<16x128xf32>
    %c0_25 = arith.constant 0 : index
    %c0_26 = arith.constant 0 : index
    %c0_27 = arith.constant 0 : index
    %32 = vector.load %arg9[%c0_25, %c0_26, %c0_27] : memref<3x1x128xf32, #tpu.memory_space<vmem>>, vector<1x1x128xf32>
    %33 = vector.shape_cast %32 : vector<1x1x128xf32> to vector<1x128xf32>
    %34 = vector.broadcast %33 : vector<1x128xf32> to vector<16x128xf32>
    %35 = arith.addf %31, %34 : vector<16x128xf32>
    %cst_28 = arith.constant 0.000000e+00 : f32
    %36 = vector.broadcast %cst_28 : f32 to vector<16x128xf32>
    %37 = arith.maximumf %35, %36 : vector<16x128xf32>
    %38 = arith.addf %17, %37 : vector<16x128xf32>
    %39 = arith.truncf %38 : vector<16x128xf32> to vector<16x128xbf16>
    %c1 = arith.constant 1 : index
    %c0_29 = arith.constant 0 : index
    %c0_30 = arith.constant 0 : index
    %40 = vector.load %arg4[%c1, %c0_29, %c0_30] : memref<3x128x128xbf16, #tpu.memory_space<vmem>>, vector<1x128x128xbf16>
    %41 = vector.shape_cast %40 : vector<1x128x128xbf16> to vector<128x128xbf16>
    %cst_31 = arith.constant dense<0.000000e+00> : vector<16x128xf32>
    %42 = tpu.matmul %39, %41, %cst_31 {dimension_numbers = #tpu.dot_dimension_numbers<[1], [0], [0], [1], [0, 0, 1, 1], [], []>} : vector<16x128xbf16>, vector<128x128xbf16>, vector<16x128xf32> -> vector<16x128xf32>
    %c1_32 = arith.constant 1 : index
    %c0_33 = arith.constant 0 : index
    %c0_34 = arith.constant 0 : index
    %43 = vector.load %arg5[%c1_32, %c0_33, %c0_34] : memref<3x1x128xf32, #tpu.memory_space<vmem>>, vector<1x1x128xf32>
    %44 = vector.shape_cast %43 : vector<1x1x128xf32> to vector<1x128xf32>
    %45 = vector.broadcast %44 : vector<1x128xf32> to vector<16x128xf32>
    %46 = arith.addf %42, %45 : vector<16x128xf32>
    %cst_35 = arith.constant 0.000000e+00 : f32
    %47 = vector.broadcast %cst_35 : f32 to vector<16x128xf32>
    %48 = arith.maximumf %46, %47 : vector<16x128xf32>
    %49 = arith.addf %38, %48 : vector<16x128xf32>
    %50 = arith.truncf %49 : vector<16x128xf32> to vector<16x128xbf16>
    %c1_36 = arith.constant 1 : index
    %c0_37 = arith.constant 0 : index
    %c0_38 = arith.constant 0 : index
    %51 = vector.load %arg6[%c1_36, %c0_37, %c0_38] : memref<3x128x256xbf16, #tpu.memory_space<vmem>>, vector<1x128x256xbf16>
    %52 = vector.shape_cast %51 : vector<1x128x256xbf16> to vector<128x256xbf16>
    %cst_39 = arith.constant dense<0.000000e+00> : vector<16x256xf32>
    %53 = tpu.matmul %50, %52, %cst_39 {dimension_numbers = #tpu.dot_dimension_numbers<[1], [0], [0], [1], [0, 0, 1, 1], [], []>} : vector<16x128xbf16>, vector<128x256xbf16>, vector<16x256xf32> -> vector<16x256xf32>
    %c1_40 = arith.constant 1 : index
    %c0_41 = arith.constant 0 : index
    %c0_42 = arith.constant 0 : index
    %54 = vector.load %arg7[%c1_40, %c0_41, %c0_42] : memref<3x1x256xf32, #tpu.memory_space<vmem>>, vector<1x1x256xf32>
    %55 = vector.shape_cast %54 : vector<1x1x256xf32> to vector<1x256xf32>
    %56 = vector.broadcast %55 : vector<1x256xf32> to vector<16x256xf32>
    %57 = arith.addf %53, %56 : vector<16x256xf32>
    %cst_43 = arith.constant 0.000000e+00 : f32
    %58 = vector.broadcast %cst_43 : f32 to vector<16x256xf32>
    %59 = arith.maximumf %57, %58 : vector<16x256xf32>
    %60 = arith.truncf %59 : vector<16x256xf32> to vector<16x256xbf16>
    %c1_44 = arith.constant 1 : index
    %c0_45 = arith.constant 0 : index
    %c0_46 = arith.constant 0 : index
    %61 = vector.load %arg8[%c1_44, %c0_45, %c0_46] : memref<3x256x128xbf16, #tpu.memory_space<vmem>>, vector<1x256x128xbf16>
    %62 = vector.shape_cast %61 : vector<1x256x128xbf16> to vector<256x128xbf16>
    %cst_47 = arith.constant dense<0.000000e+00> : vector<16x128xf32>
    %63 = tpu.matmul %60, %62, %cst_47 {dimension_numbers = #tpu.dot_dimension_numbers<[1], [0], [0], [1], [0, 0, 1, 1], [], []>} : vector<16x256xbf16>, vector<256x128xbf16>, vector<16x128xf32> -> vector<16x128xf32>
    %c1_48 = arith.constant 1 : index
    %c0_49 = arith.constant 0 : index
    %c0_50 = arith.constant 0 : index
    %64 = vector.load %arg9[%c1_48, %c0_49, %c0_50] : memref<3x1x128xf32, #tpu.memory_space<vmem>>, vector<1x1x128xf32>
    %65 = vector.shape_cast %64 : vector<1x1x128xf32> to vector<1x128xf32>
    %66 = vector.broadcast %65 : vector<1x128xf32> to vector<16x128xf32>
    %67 = arith.addf %63, %66 : vector<16x128xf32>
    %cst_51 = arith.constant 0.000000e+00 : f32
    %68 = vector.broadcast %cst_51 : f32 to vector<16x128xf32>
    %69 = arith.maximumf %67, %68 : vector<16x128xf32>
    %70 = arith.addf %49, %69 : vector<16x128xf32>
    %71 = arith.truncf %70 : vector<16x128xf32> to vector<16x128xbf16>
    %c2 = arith.constant 2 : index
    %c0_52 = arith.constant 0 : index
    %c0_53 = arith.constant 0 : index
    %72 = vector.load %arg4[%c2, %c0_52, %c0_53] : memref<3x128x128xbf16, #tpu.memory_space<vmem>>, vector<1x128x128xbf16>
    %73 = vector.shape_cast %72 : vector<1x128x128xbf16> to vector<128x128xbf16>
    %cst_54 = arith.constant dense<0.000000e+00> : vector<16x128xf32>
    %74 = tpu.matmul %71, %73, %cst_54 {dimension_numbers = #tpu.dot_dimension_numbers<[1], [0], [0], [1], [0, 0, 1, 1], [], []>} : vector<16x128xbf16>, vector<128x128xbf16>, vector<16x128xf32> -> vector<16x128xf32>
    %c2_55 = arith.constant 2 : index
    %c0_56 = arith.constant 0 : index
    %c0_57 = arith.constant 0 : index
    %75 = vector.load %arg5[%c2_55, %c0_56, %c0_57] : memref<3x1x128xf32, #tpu.memory_space<vmem>>, vector<1x1x128xf32>
    %76 = vector.shape_cast %75 : vector<1x1x128xf32> to vector<1x128xf32>
    %77 = vector.broadcast %76 : vector<1x128xf32> to vector<16x128xf32>
    %78 = arith.addf %74, %77 : vector<16x128xf32>
    %cst_58 = arith.constant 0.000000e+00 : f32
    %79 = vector.broadcast %cst_58 : f32 to vector<16x128xf32>
    %80 = arith.maximumf %78, %79 : vector<16x128xf32>
    %81 = arith.addf %70, %80 : vector<16x128xf32>
    %82 = arith.truncf %81 : vector<16x128xf32> to vector<16x128xbf16>
    %c2_59 = arith.constant 2 : index
    %c0_60 = arith.constant 0 : index
    %c0_61 = arith.constant 0 : index
    %83 = vector.load %arg6[%c2_59, %c0_60, %c0_61] : memref<3x128x256xbf16, #tpu.memory_space<vmem>>, vector<1x128x256xbf16>
    %84 = vector.shape_cast %83 : vector<1x128x256xbf16> to vector<128x256xbf16>
    %cst_62 = arith.constant dense<0.000000e+00> : vector<16x256xf32>
    %85 = tpu.matmul %82, %84, %cst_62 {dimension_numbers = #tpu.dot_dimension_numbers<[1], [0], [0], [1], [0, 0, 1, 1], [], []>} : vector<16x128xbf16>, vector<128x256xbf16>, vector<16x256xf32> -> vector<16x256xf32>
    %c2_63 = arith.constant 2 : index
    %c0_64 = arith.constant 0 : index
    %c0_65 = arith.constant 0 : index
    %86 = vector.load %arg7[%c2_63, %c0_64, %c0_65] : memref<3x1x256xf32, #tpu.memory_space<vmem>>, vector<1x1x256xf32>
    %87 = vector.shape_cast %86 : vector<1x1x256xf32> to vector<1x256xf32>
    %88 = vector.broadcast %87 : vector<1x256xf32> to vector<16x256xf32>
    %89 = arith.addf %85, %88 : vector<16x256xf32>
    %cst_66 = arith.constant 0.000000e+00 : f32
    %90 = vector.broadcast %cst_66 : f32 to vector<16x256xf32>
    %91 = arith.maximumf %89, %90 : vector<16x256xf32>
    %92 = arith.truncf %91 : vector<16x256xf32> to vector<16x256xbf16>
    %c2_67 = arith.constant 2 : index
    %c0_68 = arith.constant 0 : index
    %c0_69 = arith.constant 0 : index
    %93 = vector.load %arg8[%c2_67, %c0_68, %c0_69] : memref<3x256x128xbf16, #tpu.memory_space<vmem>>, vector<1x256x128xbf16>
    %94 = vector.shape_cast %93 : vector<1x256x128xbf16> to vector<256x128xbf16>
    %cst_70 = arith.constant dense<0.000000e+00> : vector<16x128xf32>
    %95 = tpu.matmul %92, %94, %cst_70 {dimension_numbers = #tpu.dot_dimension_numbers<[1], [0], [0], [1], [0, 0, 1, 1], [], []>} : vector<16x256xbf16>, vector<256x128xbf16>, vector<16x128xf32> -> vector<16x128xf32>
    %c2_71 = arith.constant 2 : index
    %c0_72 = arith.constant 0 : index
    %c0_73 = arith.constant 0 : index
    %96 = vector.load %arg9[%c2_71, %c0_72, %c0_73] : memref<3x1x128xf32, #tpu.memory_space<vmem>>, vector<1x1x128xf32>
    %97 = vector.shape_cast %96 : vector<1x1x128xf32> to vector<1x128xf32>
    %98 = vector.broadcast %97 : vector<1x128xf32> to vector<16x128xf32>
    %99 = arith.addf %95, %98 : vector<16x128xf32>
    %cst_74 = arith.constant 0.000000e+00 : f32
    %100 = vector.broadcast %cst_74 : f32 to vector<16x128xf32>
    %101 = arith.maximumf %99, %100 : vector<16x128xf32>
    %102 = arith.addf %81, %101 : vector<16x128xf32>
    %103 = arith.truncf %102 : vector<16x128xf32> to vector<16x128xbf16>
    %c0_75 = arith.constant 0 : index
    %c0_76 = arith.constant 0 : index
    %104 = vector.load %arg10[%c0_75, %c0_76] : memref<128x128xbf16, #tpu.memory_space<vmem>>, vector<128x128xbf16>
    %cst_77 = arith.constant dense<0.000000e+00> : vector<16x128xf32>
    %105 = tpu.matmul %103, %104, %cst_77 {dimension_numbers = #tpu.dot_dimension_numbers<[1], [0], [0], [1], [0, 0, 1, 1], [], []>} : vector<16x128xbf16>, vector<128x128xbf16>, vector<16x128xf32> -> vector<16x128xf32>
    %c0_78 = arith.constant 0 : index
    %c0_79 = arith.constant 0 : index
    %106 = vector.load %arg11[%c0_78, %c0_79] : memref<1x128xf32, #tpu.memory_space<vmem>>, vector<1x128xf32>
    %107 = vector.broadcast %106 : vector<1x128xf32> to vector<16x128xf32>
    %108 = arith.addf %105, %107 : vector<16x128xf32>
    %cst_80 = arith.constant 0.000000e+00 : f32
    %109 = vector.broadcast %cst_80 : f32 to vector<16x128xf32>
    %110 = arith.maximumf %108, %109 : vector<16x128xf32>
    %111 = arith.truncf %110 : vector<16x128xf32> to vector<16x128xbf16>
    %c0_81 = arith.constant 0 : index
    %c0_82 = arith.constant 0 : index
    %112 = vector.load %arg12[%c0_81, %c0_82] : memref<128x128xbf16, #tpu.memory_space<vmem>>, vector<128x128xbf16>
    %cst_83 = arith.constant dense<0.000000e+00> : vector<16x128xf32>
    %113 = tpu.matmul %111, %112, %cst_83 {dimension_numbers = #tpu.dot_dimension_numbers<[1], [0], [0], [1], [0, 0, 1, 1], [], []>} : vector<16x128xbf16>, vector<128x128xbf16>, vector<16x128xf32> -> vector<16x128xf32>
    %c0_84 = arith.constant 0 : index
    %c0_85 = arith.constant 0 : index
    %114 = vector.load %arg13[%c0_84, %c0_85] : memref<1x128xf32, #tpu.memory_space<vmem>>, vector<1x128xf32>
    %115 = vector.broadcast %114 : vector<1x128xf32> to vector<16x128xf32>
    %116 = arith.addf %113, %115 : vector<16x128xf32>
    %c0_86 = arith.constant 0 : index
    %c0_87 = arith.constant 0 : index
    %117 = vector.load %arg14[%c0_86, %c0_87] : memref<16x128xf32, #tpu.memory_space<vmem>>, vector<16x128xf32>
    tpu.vector_store %arg14[%c0_86, %c0_87], %116 {strides = array<i32>} : memref<16x128xf32, #tpu.memory_space<vmem>>, vector<16x128xf32>,
    return
  }
  func.func @transform_0(%arg0: i32) -> (i32, i32) {
    %c0_i32 = arith.constant 0 : i32
    %c0_i32_0 = arith.constant 0 : i32
    return %arg0, %c0_i32 : i32, i32
  }
  func.func @transform_1(%arg0: i32) -> (i32, i32) {
    %c0_i32 = arith.constant 0 : i32
    %c0_i32_0 = arith.constant 0 : i32
    %c0_i32_1 = arith.constant 0 : i32
    return %c0_i32, %c0_i32_0 : i32, i32
  }
  func.func @transform_2(%arg0: i32) -> (i32, i32) {
    %c0_i32 = arith.constant 0 : i32
    %c0_i32_0 = arith.constant 0 : i32
    %c0_i32_1 = arith.constant 0 : i32
    return %c0_i32, %c0_i32_0 : i32, i32
  }
  func.func @transform_3(%arg0: i32) -> (i32, i32, i32) {
    %c0_i32 = arith.constant 0 : i32
    %c0_i32_0 = arith.constant 0 : i32
    %c0_i32_1 = arith.constant 0 : i32
    %c0_i32_2 = arith.constant 0 : i32
    return %c0_i32, %c0_i32_0, %c0_i32_1 : i32, i32, i32
  }
  func.func @transform_4(%arg0: i32) -> (i32, i32, i32) {
    %c0_i32 = arith.constant 0 : i32
    %c0_i32_0 = arith.constant 0 : i32
    %c0_i32_1 = arith.constant 0 : i32
    %c0_i32_2 = arith.constant 0 : i32
    return %c0_i32, %c0_i32_0, %c0_i32_1 : i32, i32, i32
  }
  func.func @transform_5(%arg0: i32) -> (i32, i32, i32) {
    %c0_i32 = arith.constant 0 : i32
    %c0_i32_0 = arith.constant 0 : i32
    %c0_i32_1 = arith.constant 0 : i32
    %c0_i32_2 = arith.constant 0 : i32
    return %c0_i32, %c0_i32_0, %c0_i32_1 : i32, i32, i32
  }
  func.func @transform_6(%arg0: i32) -> (i32, i32, i32) {
    %c0_i32 = arith.constant 0 : i32
    %c0_i32_0 = arith.constant 0 : i32
    %c0_i32_1 = arith.constant 0 : i32
    %c0_i32_2 = arith.constant 0 : i32
    return %c0_i32, %c0_i32_0, %c0_i32_1 : i32, i32, i32
  }
  func.func @transform_7(%arg0: i32) -> (i32, i32, i32) {
    %c0_i32 = arith.constant 0 : i32
    %c0_i32_0 = arith.constant 0 : i32
    %c0_i32_1 = arith.constant 0 : i32
    %c0_i32_2 = arith.constant 0 : i32
    return %c0_i32, %c0_i32_0, %c0_i32_1 : i32, i32, i32
  }
  func.func @transform_8(%arg0: i32) -> (i32, i32, i32) {
    %c0_i32 = arith.constant 0 : i32
    %c0_i32_0 = arith.constant 0 : i32
    %c0_i32_1 = arith.constant 0 : i32
    %c0_i32_2 = arith.constant 0 : i32
    return %c0_i32, %c0_i32_0, %c0_i32_1 : i32, i32, i32
  }
  func.func @transform_9(%arg0: i32) -> (i32, i32) {
    %c0_i32 = arith.constant 0 : i32
    %c0_i32_0 = arith.constant 0 : i32
    %c0_i32_1 = arith.constant 0 : i32
    return %c0_i32, %c0_i32_0 : i32, i32
  }
  func.func @transform_10(%arg0: i32) -> (i32, i32) {
    %c0_i32 = arith.constant 0 : i32
    %c0_i32_0 = arith.constant 0 : i32
    %c0_i32_1 = arith.constant 0 : i32
    return %c0_i32, %c0_i32_0 : i32, i32
  }
  func.func @transform_11(%arg0: i32) -> (i32, i32) {
    %c0_i32 = arith.constant 0 : i32
    %c0_i32_0 = arith.constant 0 : i32
    %c0_i32_1 = arith.constant 0 : i32
    return %c0_i32, %c0_i32_0 : i32, i32
  }
  func.func @transform_12(%arg0: i32) -> (i32, i32) {
    %c0_i32 = arith.constant 0 : i32
    %c0_i32_0 = arith.constant 0 : i32
    %c0_i32_1 = arith.constant 0 : i32
    return %c0_i32, %c0_i32_0 : i32, i32
  }
  func.func @transform_13(%arg0: i32) -> (i32, i32) {
    %c0_i32 = arith.constant 0 : i32
    %c0_i32_0 = arith.constant 0 : i32
    return %arg0, %c0_i32 : i32, i32
  }
}

</mosaic_0001>

<llo_original>
// kernel: qnetwork_forward.1
$region0: #{qnetwork_forward.1}
  #allocation0 [shape = 'u32[]', space=smem, size = 0x4, offset = 0x4, fixed_abs, tag = 'smem constant byte address 0x4 - core index']
  #allocation1 [shape = 'u32[144,128]{1,0:T(1,128)}', space=vmem, size = 0x12000, scoped, tag = 'internal scratch']
  %s0 = inlined_call_operand.vmem [shape: f32[16,16], index: 0, kind: input, shape index: {}]
  %s1 = inlined_call_operand.vmem [shape: bf16[16,128], index: 1, kind: input, shape index: {}]
  %s2 = inlined_call_operand.hbm [shape: f32[1,128], index: 2, kind: input, shape index: {}]
  %s3 = inlined_call_operand.hbm [shape: bf16[3,128,128], index: 3, kind: input, shape index: {}]
  %s4 = inlined_call_operand.vmem [shape: f32[3,1,128], index: 4, kind: input, shape index: {}]
  %s5 = inlined_call_operand.hbm [shape: bf16[3,128,256], index: 5, kind: input, shape index: {}]
  %s6 = inlined_call_operand.hbm [shape: f32[3,1,256], index: 6, kind: input, shape index: {}]
  %s7 = inlined_call_operand.hbm [shape: bf16[3,256,128], index: 7, kind: input, shape index: {}]
  %s8 = inlined_call_operand.vmem [shape: f32[3,1,128], index: 8, kind: input, shape index: {}]
  %s9 = inlined_call_operand.vmem [shape: bf16[128,128], index: 9, kind: input, shape index: {}]
  %s10 = inlined_call_operand.hbm [shape: f32[1,128], index: 10, kind: input, shape index: {}]
  %s11 = inlined_call_operand.hbm [shape: bf16[128,128], index: 11, kind: input, shape index: {}]
  %s12 = inlined_call_operand.hbm [shape: f32[1,128], index: 12, kind: input, shape index: {}]
  %s13 = inlined_call_operand.vmem [shape: f32[16,128], index: 13, kind: output, shape index: {}]
  %s14 = sld [smem:[#allocation0]]
  $region94: #{qnetwork_forward.1} parent=0
    _
  %s16 = ssub.s32 1, %s14
  %s17 = scalar_select 0, %s16, %s14
  $region1: #{qnetwork_forward.1} parent=0
    #allocation2 [shape = 'u8[512]{0}', space=vmem, size = 0x400, scoped, tag = 'input window, operand 2, single buffered']
    #allocation3 [shape = 's32[1]{0}', space=sflag, size = 0x4, scoped, tag = 'scoped memory for qnetwork_forward.1']
    #allocation4 [shape = 'u8[98304]{0}', space=vmem, size = 0x18000, scoped, tag = 'input window, operand 3, single buffered']
    #allocation5 [shape = 's32[1]{0}', space=sflag, size = 0x4, scoped, tag = 'scoped memory for qnetwork_forward.1']
    #allocation6 [shape = 'u8[196608]{0}', space=vmem, size = 0x30000, scoped, tag = 'input window, operand 5, single buffered']
    #allocation7 [shape = 'u8[3072]{0}', space=vmem, size = 0xc00, scoped, tag = 'input window, operand 6, single buffered']
    #allocation8 [shape = 's32[1]{0}', space=sflag, size = 0x4, scoped, tag = 'scoped memory for qnetwork_forward.1']
    #allocation9 [shape = 'u8[196608]{0}', space=vmem, size = 0x30000, scoped, tag = 'input window, operand 7, single buffered']
    #allocation10 [shape = 'u8[512]{0}', space=vmem, size = 0x400, scoped, tag = 'input window, operand 10, single buffered']
    #allocation11 [shape = 's32[1]{0}', space=sflag, size = 0x4, scoped, tag = 'scoped memory for qnetwork_forward.1']
    #allocation12 [shape = 'u8[32768]{0}', space=vmem, size = 0x8000, scoped, tag = 'input window, operand 11, single buffered']
    #allocation13 [shape = 'u8[512]{0}', space=vmem, size = 0x400, scoped, tag = 'input window, operand 12, single buffered']
    #allocation14 [shape = 's32[1]{0}', space=sflag, size = 0x4, scoped, tag = 'scoped memory for qnetwork_forward.1']
    %18 = vsyncpa [#allocation3], 0
    %19 = vsyncpa [#allocation5], 0
    %20 = vsyncpa [#allocation8], 0
    %21 = vsyncpa [#allocation11], 0
    %22 = vsyncpa [#allocation14], 0
    // Predicated region
    $region2: #{qnetwork_forward.1} parent=1 // pred_check
      _
    $region3: #{qnetwork_forward.1} parent=1 // pred_check_branch
      %24 = sbr.rel (0) target = $region5
    $region4: #{qnetwork_forward.1} parent=1 // pred_region
      _
    $region5: #{qnetwork_forward.1} parent=1 // pred_fallthru
      _
    // Predicated region
    $region6: #{qnetwork_forward.1} parent=1 // pred_check
      _
    $region7: #{qnetwork_forward.1} parent=1 // pred_check_branch
      %26 = sbr.rel (0) target = $region9
    $region8: #{qnetwork_forward.1} parent=1 // pred_region
      _
    $region9: #{qnetwork_forward.1} parent=1 // pred_fallthru
      _
    // Predicated region
    $region10: #{qnetwork_forward.1} parent=1 // pred_check
      _
    $region11: #{qnetwork_forward.1} parent=1 // pred_check_branch
      %28 = sbr.rel (0) target = $region13
    $region12: #{qnetwork_forward.1} parent=1 // pred_region
      %s30 = ssub.s32 16, 16
      %31 = vsyncadd [#allocation3], %s30
      %s33 = sshll.u32 [#allocation2], 4
      %s34 = int_to_ptr.vmem [resolvable:$true] %s33
      %36 = dma.hbm_to_vmem [thread:$0]  %s2, 16, %s34, [#allocation3]
    $region13: #{qnetwork_forward.1} parent=1 // pred_fallthru
      _
    // Predicated region
    $region14: #{qnetwork_forward.1} parent=1 // pred_check
      _
    $region15: #{qnetwork_forward.1} parent=1 // pred_check_branch
      %38 = sbr.rel (0) target = $region17
    $region16: #{qnetwork_forward.1} parent=1 // pred_region
      %s40 = ssub.s32 3072, 3072
      %41 = vsyncadd [#allocation5], %s40
      %s42 = sshll.u32 [#allocation4], 4
      %s43 = int_to_ptr.vmem [resolvable:$true] %s42
      %48 = dma.hbm_to_vmem [thread:$0]  %s3, 3072, %s43, [#allocation5], 64, 64, 4
    $region17: #{qnetwork_forward.1} parent=1 // pred_fallthru
      _
    // Predicated region
    $region18: #{qnetwork_forward.1} parent=1 // pred_check
      _
    $region19: #{qnetwork_forward.1} parent=1 // pred_check_branch
      %50 = sbr.rel (0) target = $region21
    $region20: #{qnetwork_forward.1} parent=1 // pred_region
      _
    $region21: #{qnetwork_forward.1} parent=1 // pred_fallthru
      _
    // Predicated region
    $region22: #{qnetwork_forward.1} parent=1 // pred_check
      _
    $region23: #{qnetwork_forward.1} parent=1 // pred_check_branch
      %52 = sbr.rel (0) target = $region25
    $region24: #{qnetwork_forward.1} parent=1 // pred_region
      %s54 = ssub.s32 6144, 6144
      %55 = vsyncadd [#allocation5], %s54
      %s56 = sshll.u32 [#allocation6], 4
      %s57 = int_to_ptr.vmem [resolvable:$true] %s56
      %62 = dma.hbm_to_vmem [thread:$0]  %s5, 6144, %s57, [#allocation5], 128, 128, 8
    $region25: #{qnetwork_forward.1} parent=1 // pred_fallthru
      _
    // Predicated region
    $region26: #{qnetwork_forward.1} parent=1 // pred_check
      _
    $region27: #{qnetwork_forward.1} parent=1 // pred_check_branch
      %64 = sbr.rel (0) target = $region29
    $region28: #{qnetwork_forward.1} parent=1 // pred_region
      %s66 = ssub.s32 96, 96
      %67 = vsyncadd [#allocation8], %s66
      %s68 = sshll.u32 [#allocation7], 4
      %s69 = int_to_ptr.vmem [resolvable:$true] %s68
      %74 = dma.hbm_to_vmem [thread:$0]  %s6, 96, %s69, [#allocation8], 32, 32, 2
    $region29: #{qnetwork_forward.1} parent=1 // pred_fallthru
      _
    // Predicated region
    $region30: #{qnetwork_forward.1} parent=1 // pred_check
      _
    $region31: #{qnetwork_forward.1} parent=1 // pred_check_branch
      %76 = sbr.rel (0) target = $region33
    $region32: #{qnetwork_forward.1} parent=1 // pred_region
      %s78 = ssub.s32 6144, 6144
      %79 = vsyncadd [#allocation8], %s78
      %s80 = sshll.u32 [#allocation9], 4
      %s81 = int_to_ptr.vmem [resolvable:$true] %s80
      %86 = dma.hbm_to_vmem [thread:$0]  %s7, 6144, %s81, [#allocation8], 64, 64, 4
    $region33: #{qnetwork_forward.1} parent=1 // pred_fallthru
      _
    // Predicated region
    $region34: #{qnetwork_forward.1} parent=1 // pred_check
      _
    $region35: #{qnetwork_forward.1} parent=1 // pred_check_branch
      %88 = sbr.rel (0) target = $region37
    $region36: #{qnetwork_forward.1} parent=1 // pred_region
      _
    $region37: #{qnetwork_forward.1} parent=1 // pred_fallthru
      _
    // Predicated region
    $region38: #{qnetwork_forward.1} parent=1 // pred_check
      _
    $region39: #{qnetwork_forward.1} parent=1 // pred_check_branch
      %90 = sbr.rel (0) target = $region41
    $region40: #{qnetwork_forward.1} parent=1 // pred_region
      _
    $region41: #{qnetwork_forward.1} parent=1 // pred_fallthru
      _
    // Predicated region
    $region42: #{qnetwork_forward.1} parent=1 // pred_check
      _
    $region43: #{qnetwork_forward.1} parent=1 // pred_check_branch
      %92 = sbr.rel (0) target = $region45
    $region44: #{qnetwork_forward.1} parent=1 // pred_region
      %s94 = ssub.s32 16, 16
      %95 = vsyncadd [#allocation11], %s94
      %s97 = sshll.u32 [#allocation10], 4
      %s98 = int_to_ptr.vmem [resolvable:$true] %s97
      %100 = dma.hbm_to_vmem [thread:$0]  %s10, 16, %s98, [#allocation11]
    $region45: #{qnetwork_forward.1} parent=1 // pred_fallthru
      _
    // Predicated region
    $region46: #{qnetwork_forward.1} parent=1 // pred_check
      _
    $region47: #{qnetwork_forward.1} parent=1 // pred_check_branch
      %102 = sbr.rel (0) target = $region49
    $region48: #{qnetwork_forward.1} parent=1 // pred_region
      %s104 = ssub.s32 1024, 1024
      %105 = vsyncadd [#allocation11], %s104
      %s106 = sshll.u32 [#allocation12], 4
      %s107 = int_to_ptr.vmem [resolvable:$true] %s106
      %112 = dma.hbm_to_vmem [thread:$0]  %s11, 1024, %s107, [#allocation11], 64, 64, 4
    $region49: #{qnetwork_forward.1} parent=1 // pred_fallthru
      _
    // Predicated region
    $region50: #{qnetwork_forward.1} parent=1 // pred_check
      _
    $region51: #{qnetwork_forward.1} parent=1 // pred_check_branch
      %114 = sbr.rel (0) target = $region53
    $region52: #{qnetwork_forward.1} parent=1 // pred_region
      %s116 = ssub.s32 16, 16
      %117 = vsyncadd [#allocation14], %s116
      %s119 = sshll.u32 [#allocation13], 4
      %s120 = int_to_ptr.vmem [resolvable:$true] %s119
      %122 = dma.hbm_to_vmem [thread:$0]  %s12, 16, %s120, [#allocation14]
    $region53: #{qnetwork_forward.1} parent=1 // pred_fallthru
      _
    // Predicated region
    $region54: #{qnetwork_forward.1} parent=1 // pred_check
      _
    $region55: #{qnetwork_forward.1} parent=1 // pred_check_branch
      %124 = sbr.rel (0) target = $region57
    $region56: #{qnetwork_forward.1} parent=1 // pred_region
      %125 = dma.done [#allocation3], 16
    $region57: #{qnetwork_forward.1} parent=1 // pred_fallthru
      _
    // Predicated region
    $region58: #{qnetwork_forward.1} parent=1 // pred_check
      _
    $region59: #{qnetwork_forward.1} parent=1 // pred_check_branch
      %127 = sbr.rel (0) target = $region61
    $region60: #{qnetwork_forward.1} parent=1 // pred_region
      %128 = dma.done [#allocation5], 3072
    $region61: #{qnetwork_forward.1} parent=1 // pred_fallthru
      _
    // Predicated region
    $region62: #{qnetwork_forward.1} parent=1 // pred_check
      _
    $region63: #{qnetwork_forward.1} parent=1 // pred_check_branch
      %130 = sbr.rel (0) target = $region65
    $region64: #{qnetwork_forward.1} parent=1 // pred_region
      %131 = dma.done [#allocation5], 6144
    $region65: #{qnetwork_forward.1} parent=1 // pred_fallthru
      _
    // Predicated region
    $region66: #{qnetwork_forward.1} parent=1 // pred_check
      _
    $region67: #{qnetwork_forward.1} parent=1 // pred_check_branch
      %133 = sbr.rel (0) target = $region69
    $region68: #{qnetwork_forward.1} parent=1 // pred_region
      %134 = dma.done [#allocation8], 96
    $region69: #{qnetwork_forward.1} parent=1 // pred_fallthru
      _
    // Predicated region
    $region70: #{qnetwork_forward.1} parent=1 // pred_check
      _
    $region71: #{qnetwork_forward.1} parent=1 // pred_check_branch
      %136 = sbr.rel (0) target = $region73
    $region72: #{qnetwork_forward.1} parent=1 // pred_region
      %137 = dma.done [#allocation8], 6144
    $region73: #{qnetwork_forward.1} parent=1 // pred_fallthru
      _
    // Predicated region
    $region74: #{qnetwork_forward.1} parent=1 // pred_check
      _
    $region75: #{qnetwork_forward.1} parent=1 // pred_check_branch
      %139 = sbr.rel (0) target = $region77
    $region76: #{qnetwork_forward.1} parent=1 // pred_region
      %140 = dma.done [#allocation11], 16
    $region77: #{qnetwork_forward.1} parent=1 // pred_fallthru
      _
    // Predicated region
    $region78: #{qnetwork_forward.1} parent=1 // pred_check
      _
    $region79: #{qnetwork_forward.1} parent=1 // pred_check_branch
      %142 = sbr.rel (0) target = $region81
    $region80: #{qnetwork_forward.1} parent=1 // pred_region
      %143 = dma.done [#allocation11], 1024
    $region81: #{qnetwork_forward.1} parent=1 // pred_fallthru
      _
    // Predicated region
    $region82: #{qnetwork_forward.1} parent=1 // pred_check
      _
    $region83: #{qnetwork_forward.1} parent=1 // pred_check_branch
      %145 = sbr.rel (0) target = $region85
    $region84: #{qnetwork_forward.1} parent=1 // pred_region
      %146 = dma.done [#allocation14], 16
    $region85: #{qnetwork_forward.1} parent=1 // pred_fallthru
      _
    %v148 = vld [vmem:[%s0] sm:$0xff]
    %v149 = vld [vmem:[%s0 + $0x8] sm:$0xff]
    %v150 = vpack.c.bf16 %v149, %v148
    %v151 = vld [vmem:[%s1] sm:$0xf]
    %v152 = vld [vmem:[%s1 + $0x4] sm:$0xf]
    %v153 = vld [vmem:[#allocation2] sm:$0x1]
    %v155 = vlaneseq
    %v156 = vshrl.u32 %v155, 7
    %v157 = vsub.s32 0, %v156
    %v158 = vrot.slane %v153, %v157
    %v162 = vunpack.c.l.b16 %v151
    %v163 = vunpack.c.l.b16 %v152
    %v164 = vpack.c.b16 %v163, %v162
    %vm166 = vcmask 130048
    %v168 = vsel %vm166, %v150, 0
    %170 = vmatprep.subr.bf16.mxu0 0
    %171 = vmatpush1.bf16.msra.mxu0 %v164
    %172 = vmatprep.subr.bf16.mxu0 0
    %173 = vmatpush1.bf16.msra.mxu0 0
    %174 = vmatprep.subr.bf16.mxu0 0
    %175 = vmatpush1.bf16.msra.mxu0 0
    %176 = vmatprep.subr.bf16.mxu0 0
    %177 = vmatpush1.bf16.msra.mxu0 0
    %178 = vmatprep.subr.bf16.mxu0 0
    %179 = vmatpush1.bf16.msra.mxu0 0
    %180 = vmatprep.subr.bf16.mxu0 0
    %181 = vmatpush1.bf16.msra.mxu0 0
    %182 = vmatprep.subr.bf16.mxu0 0
    %183 = vmatpush1.bf16.msra.mxu0 0
    %184 = vmatprep.subr.bf16.mxu0 0
    %185 = vmatpush1.bf16.msra.mxu0 0
    %186 = vmatprep.subr.bf16.mxu0 0
    %187 = vmatpush1.bf16.msra.mxu0 0
    %188 = vmatprep.subr.bf16.mxu0 0
    %189 = vmatpush1.bf16.msra.mxu0 0
    %190 = vmatprep.subr.bf16.mxu0 0
    %191 = vmatpush1.bf16.msra.mxu0 0
    %192 = vmatprep.subr.bf16.mxu0 0
    %193 = vmatpush1.bf16.msra.mxu0 0
    %194 = vmatprep.subr.bf16.mxu0 0
    %195 = vmatpush1.bf16.msra.mxu0 0
    %196 = vmatprep.subr.bf16.mxu0 0
    %197 = vmatpush1.bf16.msra.mxu0 0
    %198 = vmatprep.subr.bf16.mxu0 0
    %199 = vmatpush1.bf16.msra.mxu0 0
    %200 = vmatprep.subr.bf16.mxu0 0
    %201 = vmatpush1.bf16.msra.mxu0 0
    %202 = vmatprep.mubr.bf16.mxu0 0
    %203 = vmatmul.mubr.bf16.gmra.mrb[0].mxu0 %v168
    %v204 = vpop.f32.mrb[0].mxu0
    %v205 = vadd.f32 %v158, %v204
    %v206 = vpop.f32.mrb[0].mxu0
    %v207 = vpop.f32.mrb[0].mxu0
    %v208 = vadd.f32 %v158, %v207
    %v209 = vpop.f32.mrb[0].mxu0
    %210 = vdwg.mxu0
    %v211 = vpack.c.bf16 %v208, %v205
    %v212 = vld [vmem:[#allocation4] sm:$0xf]
    %v213 = vld [vmem:[#allocation4 + $0x4] sm:$0xf]
    %v214 = vld [vmem:[#allocation4 + $0x8] sm:$0xf]
    %v215 = vld [vmem:[#allocation4 + $0xc] sm:$0xf]
    %v216 = vld [vmem:[#allocation4 + $0x10] sm:$0xf]
    %v217 = vld [vmem:[#allocation4 + $0x14] sm:$0xf]
    %v218 = vld [vmem:[#allocation4 + $0x18] sm:$0xf]
    %v219 = vld [vmem:[#allocation4 + $0x1c] sm:$0xf]
    %v220 = vld [vmem:[#allocation4 + $0x20] sm:$0xf]
    %v221 = vld [vmem:[#allocation4 + $0x24] sm:$0xf]
    %v222 = vld [vmem:[#allocation4 + $0x28] sm:$0xf]
    %v223 = vld [vmem:[#allocation4 + $0x2c] sm:$0xf]
    %v224 = vld [vmem:[#allocation4 + $0x30] sm:$0xf]
    %v225 = vld [vmem:[#allocation4 + $0x34] sm:$0xf]
    %v226 = vld [vmem:[#allocation4 + $0x38] sm:$0xf]
    %v227 = vld [vmem:[#allocation4 + $0x3c] sm:$0xf]
    %v228 = vld [vmem:[%s4] sm:$0x1]
    %v230 = vlaneseq
    %v231 = vshrl.u32 %v230, 7
    %v232 = vsub.s32 0, %v231
    %v233 = vrot.slane %v228, %v232
    %v251 = vunpack.c.l.b16 %v212
    %v252 = vunpack.c.l.b16 %v213
    %v253 = vunpack.c.l.b16 %v214
    %v254 = vunpack.c.l.b16 %v215
    %v255 = vunpack.c.l.b16 %v216
    %v256 = vunpack.c.l.b16 %v217
    %v257 = vunpack.c.l.b16 %v218
    %v258 = vunpack.c.l.b16 %v219
    %v259 = vunpack.c.l.b16 %v220
    %v260 = vunpack.c.l.b16 %v221
    %v261 = vunpack.c.l.b16 %v222
    %v262 = vunpack.c.l.b16 %v223
    %v263 = vunpack.c.l.b16 %v224
    %v264 = vunpack.c.l.b16 %v225
    %v265 = vunpack.c.l.b16 %v226
    %v266 = vunpack.c.l.b16 %v227
    %v267 = vpack.c.b16 %v252, %v251
    %v268 = vpack.c.b16 %v254, %v253
    %v269 = vpack.c.b16 %v256, %v255
    %v270 = vpack.c.b16 %v258, %v257
    %v271 = vpack.c.b16 %v260, %v259
    %v272 = vpack.c.b16 %v262, %v261
    %v273 = vpack.c.b16 %v264, %v263
    %v274 = vpack.c.b16 %v266, %v265
    %283 = vmatprep.subr.bf16.mxu0 0
    %284 = vmatpush1.bf16.msra.mxu0 %v267
    %285 = vmatprep.subr.bf16.mxu0 0
    %286 = vmatpush1.bf16.msra.mxu0 %v268
    %287 = vmatprep.subr.bf16.mxu0 0
    %288 = vmatpush1.bf16.msra.mxu0 %v269
    %289 = vmatprep.subr.bf16.mxu0 0
    %290 = vmatpush1.bf16.msra.mxu0 %v270
    %291 = vmatprep.subr.bf16.mxu0 0
    %292 = vmatpush1.bf16.msra.mxu0 %v271
    %293 = vmatprep.subr.bf16.mxu0 0
    %294 = vmatpush1.bf16.msra.mxu0 %v272
    %295 = vmatprep.subr.bf16.mxu0 0
    %296 = vmatpush1.bf16.msra.mxu0 %v273
    %297 = vmatprep.subr.bf16.mxu0 0
    %298 = vmatpush1.bf16.msra.mxu0 %v274
    %299 = vmatprep.subr.bf16.mxu0 0
    %300 = vmatpush1.bf16.msra.mxu0 0
    %301 = vmatprep.subr.bf16.mxu0 0
    %302 = vmatpush1.bf16.msra.mxu0 0
    %303 = vmatprep.subr.bf16.mxu0 0
    %304 = vmatpush1.bf16.msra.mxu0 0
    %305 = vmatprep.subr.bf16.mxu0 0
    %306 = vmatpush1.bf16.msra.mxu0 0
    %307 = vmatprep.subr.bf16.mxu0 0
    %308 = vmatpush1.bf16.msra.mxu0 0
    %309 = vmatprep.subr.bf16.mxu0 0
    %310 = vmatpush1.bf16.msra.mxu0 0
    %311 = vmatprep.subr.bf16.mxu0 0
    %312 = vmatpush1.bf16.msra.mxu0 0
    %313 = vmatprep.subr.bf16.mxu0 0
    %314 = vmatpush1.bf16.msra.mxu0 0
    %315 = vmatprep.mubr.bf16.mxu0 0
    %316 = vmatmul.mubr.bf16.gmra.mrb[0].mxu0 %v211
    %v317 = vpop.f32.mrb[0].mxu0
    %v318 = vadd.f32 %v233, %v317
    %v319 = vpop.f32.mrb[0].mxu0
    %v320 = vpop.f32.mrb[0].mxu0
    %v321 = vadd.f32 %v233, %v320
    %v322 = vpop.f32.mrb[0].mxu0
    %323 = vdwg.mxu0
    %v324 = vmax.f32 %v318, 0.0
    %v325 = vmax.f32 %v321, 0.0
    %v326 = vadd.f32 %v205, %v324
    %v327 = vadd.f32 %v208, %v325
    %v328 = vpack.c.bf16 %v327, %v326
    %v329 = vld [vmem:[#allocation6] sm:$0xff]
    %v330 = vld [vmem:[#allocation6 + $0x8] sm:$0xff]
    %v331 = vld [vmem:[#allocation6 + $0x10] sm:$0xff]
    %v332 = vld [vmem:[#allocation6 + $0x18] sm:$0xff]
    %v333 = vld [vmem:[#allocation6 + $0x20] sm:$0xff]
    %v334 = vld [vmem:[#allocation6 + $0x28] sm:$0xff]
    %v335 = vld [vmem:[#allocation6 + $0x30] sm:$0xff]
    %v336 = vld [vmem:[#allocation6 + $0x38] sm:$0xff]
    %v337 = vld [vmem:[#allocation6 + $0x40] sm:$0xff]
    %v338 = vld [vmem:[#allocation6 + $0x48] sm:$0xff]
    %v339 = vld [vmem:[#allocation6 + $0x50] sm:$0xff]
    %v340 = vld [vmem:[#allocation6 + $0x58] sm:$0xff]
    %v341 = vld [vmem:[#allocation6 + $0x60] sm:$0xff]
    %v342 = vld [vmem:[#allocation6 + $0x68] sm:$0xff]
    %v343 = vld [vmem:[#allocation6 + $0x70] sm:$0xff]
    %v344 = vld [vmem:[#allocation6 + $0x78] sm:$0xff]
    %v345 = vld [vmem:[#allocation7] sm:$0x3]
    %v347 = vlaneseq
    %v348 = vshrl.u32 %v347, 7
    %v349 = vsub.s32 0, %v348
    %v350 = vrot.slane %v345, %v349
    %v351 = vlaneseq
    %v352 = vshrl.u32 %v351, 7
    %v353 = vsub.s32 1, %v352
    %v354 = vrot.slane %v345, %v353
    %v373 = vunpack.c.l.b16 %v329
    %v374 = vunpack.c.h.b16 %v329
    %v375 = vunpack.c.l.b16 %v330
    %v376 = vunpack.c.h.b16 %v330
    %v377 = vunpack.c.l.b16 %v331
    %v378 = vunpack.c.h.b16 %v331
    %v379 = vunpack.c.l.b16 %v332
    %v380 = vunpack.c.h.b16 %v332
    %v381 = vunpack.c.l.b16 %v333
    %v382 = vunpack.c.h.b16 %v333
    %v383 = vunpack.c.l.b16 %v334
    %v384 = vunpack.c.h.b16 %v334
    %v385 = vunpack.c.l.b16 %v335
    %v386 = vunpack.c.h.b16 %v335
    %v387 = vunpack.c.l.b16 %v336
    %v388 = vunpack.c.h.b16 %v336
    %v389 = vunpack.c.l.b16 %v337
    %v390 = vunpack.c.h.b16 %v337
    %v391 = vunpack.c.l.b16 %v338
    %v392 = vunpack.c.h.b16 %v338
    %v393 = vunpack.c.l.b16 %v339
    %v394 = vunpack.c.h.b16 %v339
    %v395 = vunpack.c.l.b16 %v340
    %v396 = vunpack.c.h.b16 %v340
    %v397 = vunpack.c.l.b16 %v341
    %v398 = vunpack.c.h.b16 %v341
    %v399 = vunpack.c.l.b16 %v342
    %v400 = vunpack.c.h.b16 %v342
    %v401 = vunpack.c.l.b16 %v343
    %v402 = vunpack.c.h.b16 %v343
    %v403 = vunpack.c.l.b16 %v344
    %v404 = vunpack.c.h.b16 %v344
    %v405 = vpack.c.b16 %v375, %v373
    %v406 = vpack.c.b16 %v376, %v374
    %v407 = vpack.c.b16 %v379, %v377
    %v408 = vpack.c.b16 %v380, %v378
    %v409 = vpack.c.b16 %v383, %v381
    %v410 = vpack.c.b16 %v384, %v382
    %v411 = vpack.c.b16 %v387, %v385
    %v412 = vpack.c.b16 %v388, %v386
    %v413 = vpack.c.b16 %v391, %v389
    %v414 = vpack.c.b16 %v392, %v390
    %v415 = vpack.c.b16 %v395, %v393
    %v416 = vpack.c.b16 %v396, %v394
    %v417 = vpack.c.b16 %v399, %v397
    %v418 = vpack.c.b16 %v400, %v398
    %v419 = vpack.c.b16 %v403, %v401
    %v420 = vpack.c.b16 %v404, %v402
    %437 = vmatprep.subr.bf16.mxu0 %v406
    %438 = vmatpush1.bf16.msra.mxu0 %v405
    %439 = vmatprep.subr.bf16.mxu0 %v408
    %440 = vmatpush1.bf16.msra.mxu0 %v407
    %441 = vmatprep.subr.bf16.mxu0 %v410
    %442 = vmatpush1.bf16.msra.mxu0 %v409
    %443 = vmatprep.subr.bf16.mxu0 %v412
    %444 = vmatpush1.bf16.msra.mxu0 %v411
    %445 = vmatprep.subr.bf16.mxu0 %v414
    %446 = vmatpush1.bf16.msra.mxu0 %v413
    %447 = vmatprep.subr.bf16.mxu0 %v416
    %448 = vmatpush1.bf16.msra.mxu0 %v415
    %449 = vmatprep.subr.bf16.mxu0 %v418
    %450 = vmatpush1.bf16.msra.mxu0 %v417
    %451 = vmatprep.subr.bf16.mxu0 %v420
    %452 = vmatpush1.bf16.msra.mxu0 %v419
    %453 = vmatprep.subr.bf16.mxu0 0
    %454 = vmatpush1.bf16.msra.mxu0 0
    %455 = vmatprep.subr.bf16.mxu0 0
    %456 = vmatpush1.bf16.msra.mxu0 0
    %457 = vmatprep.subr.bf16.mxu0 0
    %458 = vmatpush1.bf16.msra.mxu0 0
    %459 = vmatprep.subr.bf16.mxu0 0
    %460 = vmatpush1.bf16.msra.mxu0 0
    %461 = vmatprep.subr.bf16.mxu0 0
    %462 = vmatpush1.bf16.msra.mxu0 0
    %463 = vmatprep.subr.bf16.mxu0 0
    %464 = vmatpush1.bf16.msra.mxu0 0
    %465 = vmatprep.subr.bf16.mxu0 0
    %466 = vmatpush1.bf16.msra.mxu0 0
    %467 = vmatprep.subr.bf16.mxu0 0
    %468 = vmatpush1.bf16.msra.mxu0 0
    %469 = vmatprep.mubr.bf16.mxu0 0
    %470 = vmatmul.mubr.bf16.gmra.mrb[0].mxu0 %v328
    %v471 = vpop.f32.mrb[0].mxu0
    %v472 = vadd.f32 %v350, %v471
    %v473 = vpop.f32.mrb[0].mxu0
    %v474 = vadd.f32 %v354, %v473
    %v475 = vpop.f32.mrb[0].mxu0
    %v476 = vadd.f32 %v350, %v475
    %v477 = vpop.f32.mrb[0].mxu0
    %v478 = vadd.f32 %v354, %v477
    %479 = vdwg.mxu0
    %v480 = vmax.f32 %v472, 0.0
    %v481 = vmax.f32 %v474, 0.0
    %v482 = vmax.f32 %v476, 0.0
    %v483 = vmax.f32 %v478, 0.0
    %v484 = vpack.c.bf16 %v482, %v480
    %v485 = vpack.c.bf16 %v483, %v481
    %v486 = vld [vmem:[#allocation9] sm:$0xf]
    %v487 = vld [vmem:[#allocation9 + $0x4] sm:$0xf]
    %v488 = vld [vmem:[#allocation9 + $0x8] sm:$0xf]
    %v489 = vld [vmem:[#allocation9 + $0xc] sm:$0xf]
    %v490 = vld [vmem:[#allocation9 + $0x10] sm:$0xf]
    %v491 = vld [vmem:[#allocation9 + $0x14] sm:$0xf]
    %v492 = vld [vmem:[#allocation9 + $0x18] sm:$0xf]
    %v493 = vld [vmem:[#allocation9 + $0x1c] sm:$0xf]
    %v494 = vld [vmem:[#allocation9 + $0x20] sm:$0xf]
    %v495 = vld [vmem:[#allocation9 + $0x24] sm:$0xf]
    %v496 = vld [vmem:[#allocation9 + $0x28] sm:$0xf]
    %v497 = vld [vmem:[#allocation9 + $0x2c] sm:$0xf]
    %v498 = vld [vmem:[#allocation9 + $0x30] sm:$0xf]
    %v499 = vld [vmem:[#allocation9 + $0x34] sm:$0xf]
    %v500 = vld [vmem:[#allocation9 + $0x38] sm:$0xf]
    %v501 = vld [vmem:[#allocation9 + $0x3c] sm:$0xf]
    %v502 = vld [vmem:[#allocation9 + $0x40] sm:$0xf]
    %v503 = vld [vmem:[#allocation9 + $0x44] sm:$0xf]
    %v504 = vld [vmem:[#allocation9 + $0x48] sm:$0xf]
    %v505 = vld [vmem:[#allocation9 + $0x4c] sm:$0xf]
    %v506 = vld [vmem:[#allocation9 + $0x50] sm:$0xf]
    %v507 = vld [vmem:[#allocation9 + $0x54] sm:$0xf]
    %v508 = vld [vmem:[#allocation9 + $0x58] sm:$0xf]
    %v509 = vld [vmem:[#allocation9 + $0x5c] sm:$0xf]
    %v510 = vld [vmem:[#allocation9 + $0x60] sm:$0xf]
    %v511 = vld [vmem:[#allocation9 + $0x64] sm:$0xf]
    %v512 = vld [vmem:[#allocation9 + $0x68] sm:$0xf]
    %v513 = vld [vmem:[#allocation9 + $0x6c] sm:$0xf]
    %v514 = vld [vmem:[#allocation9 + $0x70] sm:$0xf]
    %v515 = vld [vmem:[#allocation9 + $0x74] sm:$0xf]
    %v516 = vld [vmem:[#allocation9 + $0x78] sm:$0xf]
    %v517 = vld [vmem:[#allocation9 + $0x7c] sm:$0xf]
    %v518 = vld [vmem:[%s8] sm:$0x1]
    %v520 = vlaneseq
    %v521 = vshrl.u32 %v520, 7
    %v522 = vsub.s32 0, %v521
    %v523 = vrot.slane %v518, %v522
    %v557 = vunpack.c.l.b16 %v486
    %v558 = vunpack.c.l.b16 %v487
    %v559 = vunpack.c.l.b16 %v488
    %v560 = vunpack.c.l.b16 %v489
    %v561 = vunpack.c.l.b16 %v490
    %v562 = vunpack.c.l.b16 %v491
    %v563 = vunpack.c.l.b16 %v492
    %v564 = vunpack.c.l.b16 %v493
    %v565 = vunpack.c.l.b16 %v494
    %v566 = vunpack.c.l.b16 %v495
    %v567 = vunpack.c.l.b16 %v496
    %v568 = vunpack.c.l.b16 %v497
    %v569 = vunpack.c.l.b16 %v498
    %v570 = vunpack.c.l.b16 %v499
    %v571 = vunpack.c.l.b16 %v500
    %v572 = vunpack.c.l.b16 %v501
    %v573 = vunpack.c.l.b16 %v502
    %v574 = vunpack.c.l.b16 %v503
    %v575 = vunpack.c.l.b16 %v504
    %v576 = vunpack.c.l.b16 %v505
    %v577 = vunpack.c.l.b16 %v506
    %v578 = vunpack.c.l.b16 %v507
    %v579 = vunpack.c.l.b16 %v508
    %v580 = vunpack.c.l.b16 %v509
    %v581 = vunpack.c.l.b16 %v510
    %v582 = vunpack.c.l.b16 %v511
    %v583 = vunpack.c.l.b16 %v512
    %v584 = vunpack.c.l.b16 %v513
    %v585 = vunpack.c.l.b16 %v514
    %v586 = vunpack.c.l.b16 %v515
    %v587 = vunpack.c.l.b16 %v516
    %v588 = vunpack.c.l.b16 %v517
    %v589 = vpack.c.b16 %v558, %v557
    %v590 = vpack.c.b16 %v560, %v559
    %v591 = vpack.c.b16 %v562, %v561
    %v592 = vpack.c.b16 %v564, %v563
    %v593 = vpack.c.b16 %v566, %v565
    %v594 = vpack.c.b16 %v568, %v567
    %v595 = vpack.c.b16 %v570, %v569
    %v596 = vpack.c.b16 %v572, %v571
    %v597 = vpack.c.b16 %v574, %v573
    %v598 = vpack.c.b16 %v576, %v575
    %v599 = vpack.c.b16 %v578, %v577
    %v600 = vpack.c.b16 %v580, %v579
    %v601 = vpack.c.b16 %v582, %v581
    %v602 = vpack.c.b16 %v584, %v583
    %v603 = vpack.c.b16 %v586, %v585
    %v604 = vpack.c.b16 %v588, %v587
    %621 = vmatprep.subr.bf16.mxu0 0
    %622 = vmatpush1.bf16.msra.mxu0 %v589
    %623 = vmatprep.subr.bf16.mxu0 0
    %624 = vmatpush1.bf16.msra.mxu0 %v590
    %625 = vmatprep.subr.bf16.mxu0 0
    %626 = vmatpush1.bf16.msra.mxu0 %v591
    %627 = vmatprep.subr.bf16.mxu0 0
    %628 = vmatpush1.bf16.msra.mxu0 %v592
    %629 = vmatprep.subr.bf16.mxu0 0
    %630 = vmatpush1.bf16.msra.mxu0 %v593
    %631 = vmatprep.subr.bf16.mxu0 0
    %632 = vmatpush1.bf16.msra.mxu0 %v594
    %633 = vmatprep.subr.bf16.mxu0 0
    %634 = vmatpush1.bf16.msra.mxu0 %v595
    %635 = vmatprep.subr.bf16.mxu0 0
    %636 = vmatpush1.bf16.msra.mxu0 %v596
    %637 = vmatprep.subr.bf16.mxu0 0
    %638 = vmatpush1.bf16.msra.mxu0 %v597
    %639 = vmatprep.subr.bf16.mxu0 0
    %640 = vmatpush1.bf16.msra.mxu0 %v598
    %641 = vmatprep.subr.bf16.mxu0 0
    %642 = vmatpush1.bf16.msra.mxu0 %v599
    %643 = vmatprep.subr.bf16.mxu0 0
    %644 = vmatpush1.bf16.msra.mxu0 %v600
    %645 = vmatprep.subr.bf16.mxu0 0
    %646 = vmatpush1.bf16.msra.mxu0 %v601
    %647 = vmatprep.subr.bf16.mxu0 0
    %648 = vmatpush1.bf16.msra.mxu0 %v602
    %649 = vmatprep.subr.bf16.mxu0 0
    %650 = vmatpush1.bf16.msra.mxu0 %v603
    %651 = vmatprep.subr.bf16.mxu0 0
    %652 = vmatpush1.bf16.msra.mxu0 %v604
    %653 = vmatprep.mubr.bf16.mxu0 %v485
    %654 = vmatmul.mubr.bf16.gmra.mrb[0].mxu0 %v484
    %v655 = vpop.f32.mrb[0].mxu0
    %v656 = vadd.f32 %v523, %v655
    %v657 = vpop.f32.mrb[0].mxu0
    %v658 = vpop.f32.mrb[0].mxu0
    %v659 = vadd.f32 %v523, %v658
    %v660 = vpop.f32.mrb[0].mxu0
    %661 = vdwg.mxu0
    %v662 = vmax.f32 %v656, 0.0
    %v663 = vmax.f32 %v659, 0.0
    %v664 = vadd.f32 %v326, %v662
    %v665 = vadd.f32 %v327, %v663
    %v666 = vpack.c.bf16 %v665, %v664
    %s667 = scalar_lea.vmem [#allocation4], 64
    %v668 = vld [vmem:[%s667] sm:$0xf]
    %v669 = vld [vmem:[%s667 + $0x4] sm:$0xf]
    %v670 = vld [vmem:[%s667 + $0x8] sm:$0xf]
    %v671 = vld [vmem:[%s667 + $0xc] sm:$0xf]
    %v672 = vld [vmem:[%s667 + $0x10] sm:$0xf]
    %v673 = vld [vmem:[%s667 + $0x14] sm:$0xf]
    %v674 = vld [vmem:[%s667 + $0x18] sm:$0xf]
    %v675 = vld [vmem:[%s667 + $0x1c] sm:$0xf]
    %v676 = vld [vmem:[%s667 + $0x20] sm:$0xf]
    %v677 = vld [vmem:[%s667 + $0x24] sm:$0xf]
    %v678 = vld [vmem:[%s667 + $0x28] sm:$0xf]
    %v679 = vld [vmem:[%s667 + $0x2c] sm:$0xf]
    %v680 = vld [vmem:[%s667 + $0x30] sm:$0xf]
    %v681 = vld [vmem:[%s667 + $0x34] sm:$0xf]
    %v682 = vld [vmem:[%s667 + $0x38] sm:$0xf]
    %v683 = vld [vmem:[%s667 + $0x3c] sm:$0xf]
    %s684 = scalar_lea.vmem %s4, 1
    %v685 = vld [vmem:[%s684] sm:$0x1]
    %v687 = vlaneseq
    %v688 = vshrl.u32 %v687, 7
    %v689 = vsub.s32 0, %v688
    %v690 = vrot.slane %v685, %v689
    %v708 = vunpack.c.l.b16 %v668
    %v709 = vunpack.c.l.b16 %v669
    %v710 = vunpack.c.l.b16 %v670
    %v711 = vunpack.c.l.b16 %v671
    %v712 = vunpack.c.l.b16 %v672
    %v713 = vunpack.c.l.b16 %v673
    %v714 = vunpack.c.l.b16 %v674
    %v715 = vunpack.c.l.b16 %v675
    %v716 = vunpack.c.l.b16 %v676
    %v717 = vunpack.c.l.b16 %v677
    %v718 = vunpack.c.l.b16 %v678
    %v719 = vunpack.c.l.b16 %v679
    %v720 = vunpack.c.l.b16 %v680
    %v721 = vunpack.c.l.b16 %v681
    %v722 = vunpack.c.l.b16 %v682
    %v723 = vunpack.c.l.b16 %v683
    %v724 = vpack.c.b16 %v709, %v708
    %v725 = vpack.c.b16 %v711, %v710
    %v726 = vpack.c.b16 %v713, %v712
    %v727 = vpack.c.b16 %v715, %v714
    %v728 = vpack.c.b16 %v717, %v716
    %v729 = vpack.c.b16 %v719, %v718
    %v730 = vpack.c.b16 %v721, %v720
    %v731 = vpack.c.b16 %v723, %v722
    %740 = vmatprep.subr.bf16.mxu0 0
    %741 = vmatpush1.bf16.msra.mxu0 %v724
    %742 = vmatprep.subr.bf16.mxu0 0
    %743 = vmatpush1.bf16.msra.mxu0 %v725
    %744 = vmatprep.subr.bf16.mxu0 0
    %745 = vmatpush1.bf16.msra.mxu0 %v726
    %746 = vmatprep.subr.bf16.mxu0 0
    %747 = vmatpush1.bf16.msra.mxu0 %v727
    %748 = vmatprep.subr.bf16.mxu0 0
    %749 = vmatpush1.bf16.msra.mxu0 %v728
    %750 = vmatprep.subr.bf16.mxu0 0
    %751 = vmatpush1.bf16.msra.mxu0 %v729
    %752 = vmatprep.subr.bf16.mxu0 0
    %753 = vmatpush1.bf16.msra.mxu0 %v730
    %754 = vmatprep.subr.bf16.mxu0 0
    %755 = vmatpush1.bf16.msra.mxu0 %v731
    %756 = vmatprep.subr.bf16.mxu0 0
    %757 = vmatpush1.bf16.msra.mxu0 0
    %758 = vmatprep.subr.bf16.mxu0 0
    %759 = vmatpush1.bf16.msra.mxu0 0
    %760 = vmatprep.subr.bf16.mxu0 0
    %761 = vmatpush1.bf16.msra.mxu0 0
    %762 = vmatprep.subr.bf16.mxu0 0
    %763 = vmatpush1.bf16.msra.mxu0 0
    %764 = vmatprep.subr.bf16.mxu0 0
    %765 = vmatpush1.bf16.msra.mxu0 0
    %766 = vmatprep.subr.bf16.mxu0 0
    %767 = vmatpush1.bf16.msra.mxu0 0
    %768 = vmatprep.subr.bf16.mxu0 0
    %769 = vmatpush1.bf16.msra.mxu0 0
    %770 = vmatprep.subr.bf16.mxu0 0
    %771 = vmatpush1.bf16.msra.mxu0 0
    %772 = vmatprep.mubr.bf16.mxu0 0
    %773 = vmatmul.mubr.bf16.gmra.mrb[0].mxu0 %v666
    %v774 = vpop.f32.mrb[0].mxu0
    %v775 = vadd.f32 %v690, %v774
    %v776 = vpop.f32.mrb[0].mxu0
    %v777 = vpop.f32.mrb[0].mxu0
    %v778 = vadd.f32 %v690, %v777
    %v779 = vpop.f32.mrb[0].mxu0
    %780 = vdwg.mxu0
    %v781 = vmax.f32 %v775, 0.0
    %v782 = vmax.f32 %v778, 0.0
    %v783 = vadd.f32 %v664, %v781
    %v784 = vadd.f32 %v665, %v782
    %v785 = vpack.c.bf16 %v784, %v783
    %s786 = scalar_lea.vmem [#allocation6], 128
    %v787 = vld [vmem:[%s786] sm:$0xff]
    %v788 = vld [vmem:[%s786 + $0x8] sm:$0xff]
    %v789 = vld [vmem:[%s786 + $0x10] sm:$0xff]
    %v790 = vld [vmem:[%s786 + $0x18] sm:$0xff]
    %v791 = vld [vmem:[%s786 + $0x20] sm:$0xff]
    %v792 = vld [vmem:[%s786 + $0x28] sm:$0xff]
    %v793 = vld [vmem:[%s786 + $0x30] sm:$0xff]
    %v794 = vld [vmem:[%s786 + $0x38] sm:$0xff]
    %v795 = vld [vmem:[%s786 + $0x40] sm:$0xff]
    %v796 = vld [vmem:[%s786 + $0x48] sm:$0xff]
    %v797 = vld [vmem:[%s786 + $0x50] sm:$0xff]
    %v798 = vld [vmem:[%s786 + $0x58] sm:$0xff]
    %v799 = vld [vmem:[%s786 + $0x60] sm:$0xff]
    %v800 = vld [vmem:[%s786 + $0x68] sm:$0xff]
    %v801 = vld [vmem:[%s786 + $0x70] sm:$0xff]
    %v802 = vld [vmem:[%s786 + $0x78] sm:$0xff]
    %s803 = scalar_lea.vmem [#allocation7], 2
    %v804 = vld [vmem:[%s803] sm:$0x3]
    %v806 = vlaneseq
    %v807 = vshrl.u32 %v806, 7
    %v808 = vsub.s32 0, %v807
    %v809 = vrot.slane %v804, %v808
    %v810 = vlaneseq
    %v811 = vshrl.u32 %v810, 7
    %v812 = vsub.s32 1, %v811
    %v813 = vrot.slane %v804, %v812
    %v832 = vunpack.c.l.b16 %v787
    %v833 = vunpack.c.h.b16 %v787
    %v834 = vunpack.c.l.b16 %v788
    %v835 = vunpack.c.h.b16 %v788
    %v836 = vunpack.c.l.b16 %v789
    %v837 = vunpack.c.h.b16 %v789
    %v838 = vunpack.c.l.b16 %v790
    %v839 = vunpack.c.h.b16 %v790
    %v840 = vunpack.c.l.b16 %v791
    %v841 = vunpack.c.h.b16 %v791
    %v842 = vunpack.c.l.b16 %v792
    %v843 = vunpack.c.h.b16 %v792
    %v844 = vunpack.c.l.b16 %v793
    %v845 = vunpack.c.h.b16 %v793
    %v846 = vunpack.c.l.b16 %v794
    %v847 = vunpack.c.h.b16 %v794
    %v848 = vunpack.c.l.b16 %v795
    %v849 = vunpack.c.h.b16 %v795
    %v850 = vunpack.c.l.b16 %v796
    %v851 = vunpack.c.h.b16 %v796
    %v852 = vunpack.c.l.b16 %v797
    %v853 = vunpack.c.h.b16 %v797
    %v854 = vunpack.c.l.b16 %v798
    %v855 = vunpack.c.h.b16 %v798
    %v856 = vunpack.c.l.b16 %v799
    %v857 = vunpack.c.h.b16 %v799
    %v858 = vunpack.c.l.b16 %v800
    %v859 = vunpack.c.h.b16 %v800
    %v860 = vunpack.c.l.b16 %v801
    %v861 = vunpack.c.h.b16 %v801
    %v862 = vunpack.c.l.b16 %v802
    %v863 = vunpack.c.h.b16 %v802
    %v864 = vpack.c.b16 %v834, %v832
    %v865 = vpack.c.b16 %v835, %v833
    %v866 = vpack.c.b16 %v838, %v836
    %v867 = vpack.c.b16 %v839, %v837
    %v868 = vpack.c.b16 %v842, %v840
    %v869 = vpack.c.b16 %v843, %v841
    %v870 = vpack.c.b16 %v846, %v844
    %v871 = vpack.c.b16 %v847, %v845
    %v872 = vpack.c.b16 %v850, %v848
    %v873 = vpack.c.b16 %v851, %v849
    %v874 = vpack.c.b16 %v854, %v852
    %v875 = vpack.c.b16 %v855, %v853
    %v876 = vpack.c.b16 %v858, %v856
    %v877 = vpack.c.b16 %v859, %v857
    %v878 = vpack.c.b16 %v862, %v860
    %v879 = vpack.c.b16 %v863, %v861
    %896 = vmatprep.subr.bf16.mxu0 %v865
    %897 = vmatpush1.bf16.msra.mxu0 %v864
    %898 = vmatprep.subr.bf16.mxu0 %v867
    %899 = vmatpush1.bf16.msra.mxu0 %v866
    %900 = vmatprep.subr.bf16.mxu0 %v869
    %901 = vmatpush1.bf16.msra.mxu0 %v868
    %902 = vmatprep.subr.bf16.mxu0 %v871
    %903 = vmatpush1.bf16.msra.mxu0 %v870
    %904 = vmatprep.subr.bf16.mxu0 %v873
    %905 = vmatpush1.bf16.msra.mxu0 %v872
    %906 = vmatprep.subr.bf16.mxu0 %v875
    %907 = vmatpush1.bf16.msra.mxu0 %v874
    %908 = vmatprep.subr.bf16.mxu0 %v877
    %909 = vmatpush1.bf16.msra.mxu0 %v876
    %910 = vmatprep.subr.bf16.mxu0 %v879
    %911 = vmatpush1.bf16.msra.mxu0 %v878
    %912 = vmatprep.subr.bf16.mxu0 0
    %913 = vmatpush1.bf16.msra.mxu0 0
    %914 = vmatprep.subr.bf16.mxu0 0
    %915 = vmatpush1.bf16.msra.mxu0 0
    %916 = vmatprep.subr.bf16.mxu0 0
    %917 = vmatpush1.bf16.msra.mxu0 0
    %918 = vmatprep.subr.bf16.mxu0 0
    %919 = vmatpush1.bf16.msra.mxu0 0
    %920 = vmatprep.subr.bf16.mxu0 0
    %921 = vmatpush1.bf16.msra.mxu0 0
    %922 = vmatprep.subr.bf16.mxu0 0
    %923 = vmatpush1.bf16.msra.mxu0 0
    %924 = vmatprep.subr.bf16.mxu0 0
    %925 = vmatpush1.bf16.msra.mxu0 0
    %926 = vmatprep.subr.bf16.mxu0 0
    %927 = vmatpush1.bf16.msra.mxu0 0
    %928 = vmatprep.mubr.bf16.mxu0 0
    %929 = vmatmul.mubr.bf16.gmra.mrb[0].mxu0 %v785
    %v930 = vpop.f32.mrb[0].mxu0
    %v931 = vadd.f32 %v809, %v930
    %v932 = vpop.f32.mrb[0].mxu0
    %v933 = vadd.f32 %v813, %v932
    %v934 = vpop.f32.mrb[0].mxu0
    %v935 = vadd.f32 %v809, %v934
    %v936 = vpop.f32.mrb[0].mxu0
    %v937 = vadd.f32 %v813, %v936
    %938 = vdwg.mxu0
    %v939 = vmax.f32 %v931, 0.0
    %v940 = vmax.f32 %v933, 0.0
    %v941 = vmax.f32 %v935, 0.0
    %v942 = vmax.f32 %v937, 0.0
    %v943 = vpack.c.bf16 %v941, %v939
    %v944 = vpack.c.bf16 %v942, %v940
    %s945 = scalar_lea.vmem [#allocation9], 128
    %v946 = vld [vmem:[%s945] sm:$0xf]
    %v947 = vld [vmem:[%s945 + $0x4] sm:$0xf]
    %v948 = vld [vmem:[%s945 + $0x8] sm:$0xf]
    %v949 = vld [vmem:[%s945 + $0xc] sm:$0xf]
    %v950 = vld [vmem:[%s945 + $0x10] sm:$0xf]
    %v951 = vld [vmem:[%s945 + $0x14] sm:$0xf]
    %v952 = vld [vmem:[%s945 + $0x18] sm:$0xf]
    %v953 = vld [vmem:[%s945 + $0x1c] sm:$0xf]
    %v954 = vld [vmem:[%s945 + $0x20] sm:$0xf]
    %v955 = vld [vmem:[%s945 + $0x24] sm:$0xf]
    %v956 = vld [vmem:[%s945 + $0x28] sm:$0xf]
    %v957 = vld [vmem:[%s945 + $0x2c] sm:$0xf]
    %v958 = vld [vmem:[%s945 + $0x30] sm:$0xf]
    %v959 = vld [vmem:[%s945 + $0x34] sm:$0xf]
    %v960 = vld [vmem:[%s945 + $0x38] sm:$0xf]
    %v961 = vld [vmem:[%s945 + $0x3c] sm:$0xf]
    %v962 = vld [vmem:[%s945 + $0x40] sm:$0xf]
    %v963 = vld [vmem:[%s945 + $0x44] sm:$0xf]
    %v964 = vld [vmem:[%s945 + $0x48] sm:$0xf]
    %v965 = vld [vmem:[%s945 + $0x4c] sm:$0xf]
    %v966 = vld [vmem:[%s945 + $0x50] sm:$0xf]
    %v967 = vld [vmem:[%s945 + $0x54] sm:$0xf]
    %v968 = vld [vmem:[%s945 + $0x58] sm:$0xf]
    %v969 = vld [vmem:[%s945 + $0x5c] sm:$0xf]
    %v970 = vld [vmem:[%s945 + $0x60] sm:$0xf]
    %v971 = vld [vmem:[%s945 + $0x64] sm:$0xf]
    %v972 = vld [vmem:[%s945 + $0x68] sm:$0xf]
    %v973 = vld [vmem:[%s945 + $0x6c] sm:$0xf]
    %v974 = vld [vmem:[%s945 + $0x70] sm:$0xf]
    %v975 = vld [vmem:[%s945 + $0x74] sm:$0xf]
    %v976 = vld [vmem:[%s945 + $0x78] sm:$0xf]
    %v977 = vld [vmem:[%s945 + $0x7c] sm:$0xf]
    %s978 = scalar_lea.vmem %s8, 1
    %v979 = vld [vmem:[%s978] sm:$0x1]
    %v981 = vlaneseq
    %v982 = vshrl.u32 %v981, 7
    %v983 = vsub.s32 0, %v982
    %v984 = vrot.slane %v979, %v983
    %v1018 = vunpack.c.l.b16 %v946
    %v1019 = vunpack.c.l.b16 %v947
    %v1020 = vunpack.c.l.b16 %v948
    %v1021 = vunpack.c.l.b16 %v949
    %v1022 = vunpack.c.l.b16 %v950
    %v1023 = vunpack.c.l.b16 %v951
    %v1024 = vunpack.c.l.b16 %v952
    %v1025 = vunpack.c.l.b16 %v953
    %v1026 = vunpack.c.l.b16 %v954
    %v1027 = vunpack.c.l.b16 %v955
    %v1028 = vunpack.c.l.b16 %v956
    %v1029 = vunpack.c.l.b16 %v957
    %v1030 = vunpack.c.l.b16 %v958
    %v1031 = vunpack.c.l.b16 %v959
    %v1032 = vunpack.c.l.b16 %v960
    %v1033 = vunpack.c.l.b16 %v961
    %v1034 = vunpack.c.l.b16 %v962
    %v1035 = vunpack.c.l.b16 %v963
    %v1036 = vunpack.c.l.b16 %v964
    %v1037 = vunpack.c.l.b16 %v965
    %v1038 = vunpack.c.l.b16 %v966
    %v1039 = vunpack.c.l.b16 %v967
    %v1040 = vunpack.c.l.b16 %v968
    %v1041 = vunpack.c.l.b16 %v969
    %v1042 = vunpack.c.l.b16 %v970
    %v1043 = vunpack.c.l.b16 %v971
    %v1044 = vunpack.c.l.b16 %v972
    %v1045 = vunpack.c.l.b16 %v973
    %v1046 = vunpack.c.l.b16 %v974
    %v1047 = vunpack.c.l.b16 %v975
    %v1048 = vunpack.c.l.b16 %v976
    %v1049 = vunpack.c.l.b16 %v977
    %v1050 = vpack.c.b16 %v1019, %v1018
    %v1051 = vpack.c.b16 %v1021, %v1020
    %v1052 = vpack.c.b16 %v1023, %v1022
    %v1053 = vpack.c.b16 %v1025, %v1024
    %v1054 = vpack.c.b16 %v1027, %v1026
    %v1055 = vpack.c.b16 %v1029, %v1028
    %v1056 = vpack.c.b16 %v1031, %v1030
    %v1057 = vpack.c.b16 %v1033, %v1032
    %v1058 = vpack.c.b16 %v1035, %v1034
    %v1059 = vpack.c.b16 %v1037, %v1036
    %v1060 = vpack.c.b16 %v1039, %v1038
    %v1061 = vpack.c.b16 %v1041, %v1040
    %v1062 = vpack.c.b16 %v1043, %v1042
    %v1063 = vpack.c.b16 %v1045, %v1044
    %v1064 = vpack.c.b16 %v1047, %v1046
    %v1065 = vpack.c.b16 %v1049, %v1048
    %1082 = vmatprep.subr.bf16.mxu0 0
    %1083 = vmatpush1.bf16.msra.mxu0 %v1050
    %1084 = vmatprep.subr.bf16.mxu0 0
    %1085 = vmatpush1.bf16.msra.mxu0 %v1051
    %1086 = vmatprep.subr.bf16.mxu0 0
    %1087 = vmatpush1.bf16.msra.mxu0 %v1052
    %1088 = vmatprep.subr.bf16.mxu0 0
    %1089 = vmatpush1.bf16.msra.mxu0 %v1053
    %1090 = vmatprep.subr.bf16.mxu0 0
    %1091 = vmatpush1.bf16.msra.mxu0 %v1054
    %1092 = vmatprep.subr.bf16.mxu0 0
    %1093 = vmatpush1.bf16.msra.mxu0 %v1055
    %1094 = vmatprep.subr.bf16.mxu0 0
    %1095 = vmatpush1.bf16.msra.mxu0 %v1056
    %1096 = vmatprep.subr.bf16.mxu0 0
    %1097 = vmatpush1.bf16.msra.mxu0 %v1057
    %1098 = vmatprep.subr.bf16.mxu0 0
    %1099 = vmatpush1.bf16.msra.mxu0 %v1058
    %1100 = vmatprep.subr.bf16.mxu0 0
    %1101 = vmatpush1.bf16.msra.mxu0 %v1059
    %1102 = vmatprep.subr.bf16.mxu0 0
    %1103 = vmatpush1.bf16.msra.mxu0 %v1060
    %1104 = vmatprep.subr.bf16.mxu0 0
    %1105 = vmatpush1.bf16.msra.mxu0 %v1061
    %1106 = vmatprep.subr.bf16.mxu0 0
    %1107 = vmatpush1.bf16.msra.mxu0 %v1062
    %1108 = vmatprep.subr.bf16.mxu0 0
    %1109 = vmatpush1.bf16.msra.mxu0 %v1063
    %1110 = vmatprep.subr.bf16.mxu0 0
    %1111 = vmatpush1.bf16.msra.mxu0 %v1064
    %1112 = vmatprep.subr.bf16.mxu0 0
    %1113 = vmatpush1.bf16.msra.mxu0 %v1065
    %1114 = vmatprep.mubr.bf16.mxu0 %v944
    %1115 = vmatmul.mubr.bf16.gmra.mrb[0].mxu0 %v943
    %v1116 = vpop.f32.mrb[0].mxu0
    %v1117 = vadd.f32 %v984, %v1116
    %v1118 = vpop.f32.mrb[0].mxu0
    %v1119 = vpop.f32.mrb[0].mxu0
    %v1120 = vadd.f32 %v984, %v1119
    %v1121 = vpop.f32.mrb[0].mxu0
    %1122 = vdwg.mxu0
    %v1123 = vmax.f32 %v1117, 0.0
    %v1124 = vmax.f32 %v1120, 0.0
    %v1125 = vadd.f32 %v783, %v1123
    %v1126 = vadd.f32 %v784, %v1124
    %v1127 = vpack.c.bf16 %v1126, %v1125
    %s1128 = scalar_lea.vmem [#allocation4], 128
    %v1129 = vld [vmem:[%s1128] sm:$0xf]
    %v1130 = vld [vmem:[%s1128 + $0x4] sm:$0xf]
    %v1131 = vld [vmem:[%s1128 + $0x8] sm:$0xf]
    %v1132 = vld [vmem:[%s1128 + $0xc] sm:$0xf]
    %v1133 = vld [vmem:[%s1128 + $0x10] sm:$0xf]
    %v1134 = vld [vmem:[%s1128 + $0x14] sm:$0xf]
    %v1135 = vld [vmem:[%s1128 + $0x18] sm:$0xf]
    %v1136 = vld [vmem:[%s1128 + $0x1c] sm:$0xf]
    %v1137 = vld [vmem:[%s1128 + $0x20] sm:$0xf]
    %v1138 = vld [vmem:[%s1128 + $0x24] sm:$0xf]
    %v1139 = vld [vmem:[%s1128 + $0x28] sm:$0xf]
    %v1140 = vld [vmem:[%s1128 + $0x2c] sm:$0xf]
    %v1141 = vld [vmem:[%s1128 + $0x30] sm:$0xf]
    %v1142 = vld [vmem:[%s1128 + $0x34] sm:$0xf]
    %v1143 = vld [vmem:[%s1128 + $0x38] sm:$0xf]
    %v1144 = vld [vmem:[%s1128 + $0x3c] sm:$0xf]
    %s1145 = scalar_lea.vmem %s4, 2
    %v1146 = vld [vmem:[%s1145] sm:$0x1]
    %v1148 = vlaneseq
    %v1149 = vshrl.u32 %v1148, 7
    %v1150 = vsub.s32 0, %v1149
    %v1151 = vrot.slane %v1146, %v1150
    %v1169 = vunpack.c.l.b16 %v1129
    %v1170 = vunpack.c.l.b16 %v1130
    %v1171 = vunpack.c.l.b16 %v1131
    %v1172 = vunpack.c.l.b16 %v1132
    %v1173 = vunpack.c.l.b16 %v1133
    %v1174 = vunpack.c.l.b16 %v1134
    %v1175 = vunpack.c.l.b16 %v1135
    %v1176 = vunpack.c.l.b16 %v1136
    %v1177 = vunpack.c.l.b16 %v1137
    %v1178 = vunpack.c.l.b16 %v1138
    %v1179 = vunpack.c.l.b16 %v1139
    %v1180 = vunpack.c.l.b16 %v1140
    %v1181 = vunpack.c.l.b16 %v1141
    %v1182 = vunpack.c.l.b16 %v1142
    %v1183 = vunpack.c.l.b16 %v1143
    %v1184 = vunpack.c.l.b16 %v1144
    %v1185 = vpack.c.b16 %v1170, %v1169
    %v1186 = vpack.c.b16 %v1172, %v1171
    %v1187 = vpack.c.b16 %v1174, %v1173
    %v1188 = vpack.c.b16 %v1176, %v1175
    %v1189 = vpack.c.b16 %v1178, %v1177
    %v1190 = vpack.c.b16 %v1180, %v1179
    %v1191 = vpack.c.b16 %v1182, %v1181
    %v1192 = vpack.c.b16 %v1184, %v1183
    %1201 = vmatprep.subr.bf16.mxu0 0
    %1202 = vmatpush1.bf16.msra.mxu0 %v1185
    %1203 = vmatprep.subr.bf16.mxu0 0
    %1204 = vmatpush1.bf16.msra.mxu0 %v1186
    %1205 = vmatprep.subr.bf16.mxu0 0
    %1206 = vmatpush1.bf16.msra.mxu0 %v1187
    %1207 = vmatprep.subr.bf16.mxu0 0
    %1208 = vmatpush1.bf16.msra.mxu0 %v1188
    %1209 = vmatprep.subr.bf16.mxu0 0
    %1210 = vmatpush1.bf16.msra.mxu0 %v1189
    %1211 = vmatprep.subr.bf16.mxu0 0
    %1212 = vmatpush1.bf16.msra.mxu0 %v1190
    %1213 = vmatprep.subr.bf16.mxu0 0
    %1214 = vmatpush1.bf16.msra.mxu0 %v1191
    %1215 = vmatprep.subr.bf16.mxu0 0
    %1216 = vmatpush1.bf16.msra.mxu0 %v1192
    %1217 = vmatprep.subr.bf16.mxu0 0
    %1218 = vmatpush1.bf16.msra.mxu0 0
    %1219 = vmatprep.subr.bf16.mxu0 0
    %1220 = vmatpush1.bf16.msra.mxu0 0
    %1221 = vmatprep.subr.bf16.mxu0 0
    %1222 = vmatpush1.bf16.msra.mxu0 0
    %1223 = vmatprep.subr.bf16.mxu0 0
    %1224 = vmatpush1.bf16.msra.mxu0 0
    %1225 = vmatprep.subr.bf16.mxu0 0
    %1226 = vmatpush1.bf16.msra.mxu0 0
    %1227 = vmatprep.subr.bf16.mxu0 0
    %1228 = vmatpush1.bf16.msra.mxu0 0
    %1229 = vmatprep.subr.bf16.mxu0 0
    %1230 = vmatpush1.bf16.msra.mxu0 0
    %1231 = vmatprep.subr.bf16.mxu0 0
    %1232 = vmatpush1.bf16.msra.mxu0 0
    %1233 = vmatprep.mubr.bf16.mxu0 0
    %1234 = vmatmul.mubr.bf16.gmra.mrb[0].mxu0 %v1127
    %v1235 = vpop.f32.mrb[0].mxu0
    %v1236 = vadd.f32 %v1151, %v1235
    %v1237 = vpop.f32.mrb[0].mxu0
    %v1238 = vpop.f32.mrb[0].mxu0
    %v1239 = vadd.f32 %v1151, %v1238
    %v1240 = vpop.f32.mrb[0].mxu0
    %1241 = vdwg.mxu0
    %v1242 = vmax.f32 %v1236, 0.0
    %v1243 = vmax.f32 %v1239, 0.0
    %v1244 = vadd.f32 %v1125, %v1242
    %v1245 = vadd.f32 %v1126, %v1243
    %v1246 = vpack.c.bf16 %v1245, %v1244
    %s1247 = scalar_lea.vmem [#allocation6], 256
    %v1248 = vld [vmem:[%s1247] sm:$0xff]
    %v1249 = vld [vmem:[%s1247 + $0x8] sm:$0xff]
    %v1250 = vld [vmem:[%s1247 + $0x10] sm:$0xff]
    %v1251 = vld [vmem:[%s1247 + $0x18] sm:$0xff]
    %v1252 = vld [vmem:[%s1247 + $0x20] sm:$0xff]
    %v1253 = vld [vmem:[%s1247 + $0x28] sm:$0xff]
    %v1254 = vld [vmem:[%s1247 + $0x30] sm:$0xff]
    %v1255 = vld [vmem:[%s1247 + $0x38] sm:$0xff]
    %v1256 = vld [vmem:[%s1247 + $0x40] sm:$0xff]
    %v1257 = vld [vmem:[%s1247 + $0x48] sm:$0xff]
    %v1258 = vld [vmem:[%s1247 + $0x50] sm:$0xff]
    %v1259 = vld [vmem:[%s1247 + $0x58] sm:$0xff]
    %v1260 = vld [vmem:[%s1247 + $0x60] sm:$0xff]
    %v1261 = vld [vmem:[%s1247 + $0x68] sm:$0xff]
    %v1262 = vld [vmem:[%s1247 + $0x70] sm:$0xff]
    %v1263 = vld [vmem:[%s1247 + $0x78] sm:$0xff]
    %s1264 = scalar_lea.vmem [#allocation7], 4
    %v1265 = vld [vmem:[%s1264] sm:$0x3]
    %v1267 = vlaneseq
    %v1268 = vshrl.u32 %v1267, 7
    %v1269 = vsub.s32 0, %v1268
    %v1270 = vrot.slane %v1265, %v1269
    %v1271 = vlaneseq
    %v1272 = vshrl.u32 %v1271, 7
    %v1273 = vsub.s32 1, %v1272
    %v1274 = vrot.slane %v1265, %v1273
    %v1293 = vunpack.c.l.b16 %v1248
    %v1294 = vunpack.c.h.b16 %v1248
    %v1295 = vunpack.c.l.b16 %v1249
    %v1296 = vunpack.c.h.b16 %v1249
    %v1297 = vunpack.c.l.b16 %v1250
    %v1298 = vunpack.c.h.b16 %v1250
    %v1299 = vunpack.c.l.b16 %v1251
    %v1300 = vunpack.c.h.b16 %v1251
    %v1301 = vunpack.c.l.b16 %v1252
    %v1302 = vunpack.c.h.b16 %v1252
    %v1303 = vunpack.c.l.b16 %v1253
    %v1304 = vunpack.c.h.b16 %v1253
    %v1305 = vunpack.c.l.b16 %v1254
    %v1306 = vunpack.c.h.b16 %v1254
    %v1307 = vunpack.c.l.b16 %v1255
    %v1308 = vunpack.c.h.b16 %v1255
    %v1309 = vunpack.c.l.b16 %v1256
    %v1310 = vunpack.c.h.b16 %v1256
    %v1311 = vunpack.c.l.b16 %v1257
    %v1312 = vunpack.c.h.b16 %v1257
    %v1313 = vunpack.c.l.b16 %v1258
    %v1314 = vunpack.c.h.b16 %v1258
    %v1315 = vunpack.c.l.b16 %v1259
    %v1316 = vunpack.c.h.b16 %v1259
    %v1317 = vunpack.c.l.b16 %v1260
    %v1318 = vunpack.c.h.b16 %v1260
    %v1319 = vunpack.c.l.b16 %v1261
    %v1320 = vunpack.c.h.b16 %v1261
    %v1321 = vunpack.c.l.b16 %v1262
    %v1322 = vunpack.c.h.b16 %v1262
    %v1323 = vunpack.c.l.b16 %v1263
    %v1324 = vunpack.c.h.b16 %v1263
    %v1325 = vpack.c.b16 %v1295, %v1293
    %v1326 = vpack.c.b16 %v1296, %v1294
    %v1327 = vpack.c.b16 %v1299, %v1297
    %v1328 = vpack.c.b16 %v1300, %v1298
    %v1329 = vpack.c.b16 %v1303, %v1301
    %v1330 = vpack.c.b16 %v1304, %v1302
    %v1331 = vpack.c.b16 %v1307, %v1305
    %v1332 = vpack.c.b16 %v1308, %v1306
    %v1333 = vpack.c.b16 %v1311, %v1309
    %v1334 = vpack.c.b16 %v1312, %v1310
    %v1335 = vpack.c.b16 %v1315, %v1313
    %v1336 = vpack.c.b16 %v1316, %v1314
    %v1337 = vpack.c.b16 %v1319, %v1317
    %v1338 = vpack.c.b16 %v1320, %v1318
    %v1339 = vpack.c.b16 %v1323, %v1321
    %v1340 = vpack.c.b16 %v1324, %v1322
    %1357 = vmatprep.subr.bf16.mxu0 %v1326
    %1358 = vmatpush1.bf16.msra.mxu0 %v1325
    %1359 = vmatprep.subr.bf16.mxu0 %v1328
    %1360 = vmatpush1.bf16.msra.mxu0 %v1327
    %1361 = vmatprep.subr.bf16.mxu0 %v1330
    %1362 = vmatpush1.bf16.msra.mxu0 %v1329
    %1363 = vmatprep.subr.bf16.mxu0 %v1332
    %1364 = vmatpush1.bf16.msra.mxu0 %v1331
    %1365 = vmatprep.subr.bf16.mxu0 %v1334
    %1366 = vmatpush1.bf16.msra.mxu0 %v1333
    %1367 = vmatprep.subr.bf16.mxu0 %v1336
    %1368 = vmatpush1.bf16.msra.mxu0 %v1335
    %1369 = vmatprep.subr.bf16.mxu0 %v1338
    %1370 = vmatpush1.bf16.msra.mxu0 %v1337
    %1371 = vmatprep.subr.bf16.mxu0 %v1340
    %1372 = vmatpush1.bf16.msra.mxu0 %v1339
    %1373 = vmatprep.subr.bf16.mxu0 0
    %1374 = vmatpush1.bf16.msra.mxu0 0
    %1375 = vmatprep.subr.bf16.mxu0 0
    %1376 = vmatpush1.bf16.msra.mxu0 0
    %1377 = vmatprep.subr.bf16.mxu0 0
    %1378 = vmatpush1.bf16.msra.mxu0 0
    %1379 = vmatprep.subr.bf16.mxu0 0
    %1380 = vmatpush1.bf16.msra.mxu0 0
    %1381 = vmatprep.subr.bf16.mxu0 0
    %1382 = vmatpush1.bf16.msra.mxu0 0
    %1383 = vmatprep.subr.bf16.mxu0 0
    %1384 = vmatpush1.bf16.msra.mxu0 0
    %1385 = vmatprep.subr.bf16.mxu0 0
    %1386 = vmatpush1.bf16.msra.mxu0 0
    %1387 = vmatprep.subr.bf16.mxu0 0
    %1388 = vmatpush1.bf16.msra.mxu0 0
    %1389 = vmatprep.mubr.bf16.mxu0 0
    %1390 = vmatmul.mubr.bf16.gmra.mrb[0].mxu0 %v1246
    %v1391 = vpop.f32.mrb[0].mxu0
    %v1392 = vadd.f32 %v1270, %v1391
    %v1393 = vpop.f32.mrb[0].mxu0
    %v1394 = vadd.f32 %v1274, %v1393
    %v1395 = vpop.f32.mrb[0].mxu0
    %v1396 = vadd.f32 %v1270, %v1395
    %v1397 = vpop.f32.mrb[0].mxu0
    %v1398 = vadd.f32 %v1274, %v1397
    %1399 = vdwg.mxu0
    %v1400 = vmax.f32 %v1392, 0.0
    %v1401 = vmax.f32 %v1394, 0.0
    %v1402 = vmax.f32 %v1396, 0.0
    %v1403 = vmax.f32 %v1398, 0.0
    %v1404 = vpack.c.bf16 %v1402, %v1400
    %v1405 = vpack.c.bf16 %v1403, %v1401
    %s1406 = scalar_lea.vmem [#allocation9], 256
    %v1407 = vld [vmem:[%s1406] sm:$0xf]
    %v1408 = vld [vmem:[%s1406 + $0x4] sm:$0xf]
    %v1409 = vld [vmem:[%s1406 + $0x8] sm:$0xf]
    %v1410 = vld [vmem:[%s1406 + $0xc] sm:$0xf]
    %v1411 = vld [vmem:[%s1406 + $0x10] sm:$0xf]
    %v1412 = vld [vmem:[%s1406 + $0x14] sm:$0xf]
    %v1413 = vld [vmem:[%s1406 + $0x18] sm:$0xf]
    %v1414 = vld [vmem:[%s1406 + $0x1c] sm:$0xf]
    %v1415 = vld [vmem:[%s1406 + $0x20] sm:$0xf]
    %v1416 = vld [vmem:[%s1406 + $0x24] sm:$0xf]
    %v1417 = vld [vmem:[%s1406 + $0x28] sm:$0xf]
    %v1418 = vld [vmem:[%s1406 + $0x2c] sm:$0xf]
    %v1419 = vld [vmem:[%s1406 + $0x30] sm:$0xf]
    %v1420 = vld [vmem:[%s1406 + $0x34] sm:$0xf]
    %v1421 = vld [vmem:[%s1406 + $0x38] sm:$0xf]
    %v1422 = vld [vmem:[%s1406 + $0x3c] sm:$0xf]
    %v1423 = vld [vmem:[%s1406 + $0x40] sm:$0xf]
    %v1424 = vld [vmem:[%s1406 + $0x44] sm:$0xf]
    %v1425 = vld [vmem:[%s1406 + $0x48] sm:$0xf]
    %v1426 = vld [vmem:[%s1406 + $0x4c] sm:$0xf]
    %v1427 = vld [vmem:[%s1406 + $0x50] sm:$0xf]
    %v1428 = vld [vmem:[%s1406 + $0x54] sm:$0xf]
    %v1429 = vld [vmem:[%s1406 + $0x58] sm:$0xf]
    %v1430 = vld [vmem:[%s1406 + $0x5c] sm:$0xf]
    %v1431 = vld [vmem:[%s1406 + $0x60] sm:$0xf]
    %v1432 = vld [vmem:[%s1406 + $0x64] sm:$0xf]
    %v1433 = vld [vmem:[%s1406 + $0x68] sm:$0xf]
    %v1434 = vld [vmem:[%s1406 + $0x6c] sm:$0xf]
    %v1435 = vld [vmem:[%s1406 + $0x70] sm:$0xf]
    %v1436 = vld [vmem:[%s1406 + $0x74] sm:$0xf]
    %v1437 = vld [vmem:[%s1406 + $0x78] sm:$0xf]
    %v1438 = vld [vmem:[%s1406 + $0x7c] sm:$0xf]
    %s1439 = scalar_lea.vmem %s8, 2
    %v1440 = vld [vmem:[%s1439] sm:$0x1]
    %v1442 = vlaneseq
    %v1443 = vshrl.u32 %v1442, 7
    %v1444 = vsub.s32 0, %v1443
    %v1445 = vrot.slane %v1440, %v1444
    %v1479 = vunpack.c.l.b16 %v1407
    %v1480 = vunpack.c.l.b16 %v1408
    %v1481 = vunpack.c.l.b16 %v1409
    %v1482 = vunpack.c.l.b16 %v1410
    %v1483 = vunpack.c.l.b16 %v1411
    %v1484 = vunpack.c.l.b16 %v1412
    %v1485 = vunpack.c.l.b16 %v1413
    %v1486 = vunpack.c.l.b16 %v1414
    %v1487 = vunpack.c.l.b16 %v1415
    %v1488 = vunpack.c.l.b16 %v1416
    %v1489 = vunpack.c.l.b16 %v1417
    %v1490 = vunpack.c.l.b16 %v1418
    %v1491 = vunpack.c.l.b16 %v1419
    %v1492 = vunpack.c.l.b16 %v1420
    %v1493 = vunpack.c.l.b16 %v1421
    %v1494 = vunpack.c.l.b16 %v1422
    %v1495 = vunpack.c.l.b16 %v1423
    %v1496 = vunpack.c.l.b16 %v1424
    %v1497 = vunpack.c.l.b16 %v1425
    %v1498 = vunpack.c.l.b16 %v1426
    %v1499 = vunpack.c.l.b16 %v1427
    %v1500 = vunpack.c.l.b16 %v1428
    %v1501 = vunpack.c.l.b16 %v1429
    %v1502 = vunpack.c.l.b16 %v1430
    %v1503 = vunpack.c.l.b16 %v1431
    %v1504 = vunpack.c.l.b16 %v1432
    %v1505 = vunpack.c.l.b16 %v1433
    %v1506 = vunpack.c.l.b16 %v1434
    %v1507 = vunpack.c.l.b16 %v1435
    %v1508 = vunpack.c.l.b16 %v1436
    %v1509 = vunpack.c.l.b16 %v1437
    %v1510 = vunpack.c.l.b16 %v1438
    %v1511 = vpack.c.b16 %v1480, %v1479
    %v1512 = vpack.c.b16 %v1482, %v1481
    %v1513 = vpack.c.b16 %v1484, %v1483
    %v1514 = vpack.c.b16 %v1486, %v1485
    %v1515 = vpack.c.b16 %v1488, %v1487
    %v1516 = vpack.c.b16 %v1490, %v1489
    %v1517 = vpack.c.b16 %v1492, %v1491
    %v1518 = vpack.c.b16 %v1494, %v1493
    %v1519 = vpack.c.b16 %v1496, %v1495
    %v1520 = vpack.c.b16 %v1498, %v1497
    %v1521 = vpack.c.b16 %v1500, %v1499
    %v1522 = vpack.c.b16 %v1502, %v1501
    %v1523 = vpack.c.b16 %v1504, %v1503
    %v1524 = vpack.c.b16 %v1506, %v1505
    %v1525 = vpack.c.b16 %v1508, %v1507
    %v1526 = vpack.c.b16 %v1510, %v1509
    %1543 = vmatprep.subr.bf16.mxu0 0
    %1544 = vmatpush1.bf16.msra.mxu0 %v1511
    %1545 = vmatprep.subr.bf16.mxu0 0
    %1546 = vmatpush1.bf16.msra.mxu0 %v1512
    %1547 = vmatprep.subr.bf16.mxu0 0
    %1548 = vmatpush1.bf16.msra.mxu0 %v1513
    %1549 = vmatprep.subr.bf16.mxu0 0
    %1550 = vmatpush1.bf16.msra.mxu0 %v1514
    %1551 = vmatprep.subr.bf16.mxu0 0
    %1552 = vmatpush1.bf16.msra.mxu0 %v1515
    %1553 = vmatprep.subr.bf16.mxu0 0
    %1554 = vmatpush1.bf16.msra.mxu0 %v1516
    %1555 = vmatprep.subr.bf16.mxu0 0
    %1556 = vmatpush1.bf16.msra.mxu0 %v1517
    %1557 = vmatprep.subr.bf16.mxu0 0
    %1558 = vmatpush1.bf16.msra.mxu0 %v1518
    %1559 = vmatprep.subr.bf16.mxu0 0
    %1560 = vmatpush1.bf16.msra.mxu0 %v1519
    %1561 = vmatprep.subr.bf16.mxu0 0
    %1562 = vmatpush1.bf16.msra.mxu0 %v1520
    %1563 = vmatprep.subr.bf16.mxu0 0
    %1564 = vmatpush1.bf16.msra.mxu0 %v1521
    %1565 = vmatprep.subr.bf16.mxu0 0
    %1566 = vmatpush1.bf16.msra.mxu0 %v1522
    %1567 = vmatprep.subr.bf16.mxu0 0
    %1568 = vmatpush1.bf16.msra.mxu0 %v1523
    %1569 = vmatprep.subr.bf16.mxu0 0
    %1570 = vmatpush1.bf16.msra.mxu0 %v1524
    %1571 = vmatprep.subr.bf16.mxu0 0
    %1572 = vmatpush1.bf16.msra.mxu0 %v1525
    %1573 = vmatprep.subr.bf16.mxu0 0
    %1574 = vmatpush1.bf16.msra.mxu0 %v1526
    %1575 = vmatprep.mubr.bf16.mxu0 %v1405
    %1576 = vmatmul.mubr.bf16.gmra.mrb[0].mxu0 %v1404
    %v1577 = vpop.f32.mrb[0].mxu0
    %v1578 = vadd.f32 %v1445, %v1577
    %v1579 = vpop.f32.mrb[0].mxu0
    %v1580 = vpop.f32.mrb[0].mxu0
    %v1581 = vadd.f32 %v1445, %v1580
    %v1582 = vpop.f32.mrb[0].mxu0
    %1583 = vdwg.mxu0
    %v1584 = vmax.f32 %v1578, 0.0
    %v1585 = vmax.f32 %v1581, 0.0
    %v1586 = vadd.f32 %v1244, %v1584
    %v1587 = vadd.f32 %v1245, %v1585
    %v1588 = vpack.c.bf16 %v1587, %v1586
    %v1589 = vld [vmem:[%s9] sm:$0xf]
    %v1590 = vld [vmem:[%s9 + $0x4] sm:$0xf]
    %v1591 = vld [vmem:[%s9 + $0x8] sm:$0xf]
    %v1592 = vld [vmem:[%s9 + $0xc] sm:$0xf]
    %v1593 = vld [vmem:[%s9 + $0x10] sm:$0xf]
    %v1594 = vld [vmem:[%s9 + $0x14] sm:$0xf]
    %v1595 = vld [vmem:[%s9 + $0x18] sm:$0xf]
    %v1596 = vld [vmem:[%s9 + $0x1c] sm:$0xf]
    %v1597 = vld [vmem:[%s9 + $0x20] sm:$0xf]
    %v1598 = vld [vmem:[%s9 + $0x24] sm:$0xf]
    %v1599 = vld [vmem:[%s9 + $0x28] sm:$0xf]
    %v1600 = vld [vmem:[%s9 + $0x2c] sm:$0xf]
    %v1601 = vld [vmem:[%s9 + $0x30] sm:$0xf]
    %v1602 = vld [vmem:[%s9 + $0x34] sm:$0xf]
    %v1603 = vld [vmem:[%s9 + $0x38] sm:$0xf]
    %v1604 = vld [vmem:[%s9 + $0x3c] sm:$0xf]
    %v1605 = vld [vmem:[#allocation10] sm:$0x1]
    %v1607 = vlaneseq
    %v1608 = vshrl.u32 %v1607, 7
    %v1609 = vsub.s32 0, %v1608
    %v1610 = vrot.slane %v1605, %v1609
    %v1628 = vunpack.c.l.b16 %v1589
    %v1629 = vunpack.c.l.b16 %v1590
    %v1630 = vunpack.c.l.b16 %v1591
    %v1631 = vunpack.c.l.b16 %v1592
    %v1632 = vunpack.c.l.b16 %v1593
    %v1633 = vunpack.c.l.b16 %v1594
    %v1634 = vunpack.c.l.b16 %v1595
    %v1635 = vunpack.c.l.b16 %v1596
    %v1636 = vunpack.c.l.b16 %v1597
    %v1637 = vunpack.c.l.b16 %v1598
    %v1638 = vunpack.c.l.b16 %v1599
    %v1639 = vunpack.c.l.b16 %v1600
    %v1640 = vunpack.c.l.b16 %v1601
    %v1641 = vunpack.c.l.b16 %v1602
    %v1642 = vunpack.c.l.b16 %v1603
    %v1643 = vunpack.c.l.b16 %v1604
    %v1644 = vpack.c.b16 %v1629, %v1628
    %v1645 = vpack.c.b16 %v1631, %v1630
    %v1646 = vpack.c.b16 %v1633, %v1632
    %v1647 = vpack.c.b16 %v1635, %v1634
    %v1648 = vpack.c.b16 %v1637, %v1636
    %v1649 = vpack.c.b16 %v1639, %v1638
    %v1650 = vpack.c.b16 %v1641, %v1640
    %v1651 = vpack.c.b16 %v1643, %v1642
    %1660 = vmatprep.subr.bf16.mxu0 0
    %1661 = vmatpush1.bf16.msra.mxu0 %v1644
    %1662 = vmatprep.subr.bf16.mxu0 0
    %1663 = vmatpush1.bf16.msra.mxu0 %v1645
    %1664 = vmatprep.subr.bf16.mxu0 0
    %1665 = vmatpush1.bf16.msra.mxu0 %v1646
    %1666 = vmatprep.subr.bf16.mxu0 0
    %1667 = vmatpush1.bf16.msra.mxu0 %v1647
    %1668 = vmatprep.subr.bf16.mxu0 0
    %1669 = vmatpush1.bf16.msra.mxu0 %v1648
    %1670 = vmatprep.subr.bf16.mxu0 0
    %1671 = vmatpush1.bf16.msra.mxu0 %v1649
    %1672 = vmatprep.subr.bf16.mxu0 0
    %1673 = vmatpush1.bf16.msra.mxu0 %v1650
    %1674 = vmatprep.subr.bf16.mxu0 0
    %1675 = vmatpush1.bf16.msra.mxu0 %v1651
    %1676 = vmatprep.subr.bf16.mxu0 0
    %1677 = vmatpush1.bf16.msra.mxu0 0
    %1678 = vmatprep.subr.bf16.mxu0 0
    %1679 = vmatpush1.bf16.msra.mxu0 0
    %1680 = vmatprep.subr.bf16.mxu0 0
    %1681 = vmatpush1.bf16.msra.mxu0 0
    %1682 = vmatprep.subr.bf16.mxu0 0
    %1683 = vmatpush1.bf16.msra.mxu0 0
    %1684 = vmatprep.subr.bf16.mxu0 0
    %1685 = vmatpush1.bf16.msra.mxu0 0
    %1686 = vmatprep.subr.bf16.mxu0 0
    %1687 = vmatpush1.bf16.msra.mxu0 0
    %1688 = vmatprep.subr.bf16.mxu0 0
    %1689 = vmatpush1.bf16.msra.mxu0 0
    %1690 = vmatprep.subr.bf16.mxu0 0
    %1691 = vmatpush1.bf16.msra.mxu0 0
    %1692 = vmatprep.mubr.bf16.mxu0 0
    %1693 = vmatmul.mubr.bf16.gmra.mrb[0].mxu0 %v1588
    %v1694 = vpop.f32.mrb[0].mxu0
    %v1695 = vadd.f32 %v1610, %v1694
    %v1696 = vpop.f32.mrb[0].mxu0
    %v1697 = vpop.f32.mrb[0].mxu0
    %v1698 = vadd.f32 %v1610, %v1697
    %v1699 = vpop.f32.mrb[0].mxu0
    %1700 = vdwg.mxu0
    %v1701 = vmax.f32 %v1695, 0.0
    %v1702 = vmax.f32 %v1698, 0.0
    %v1703 = vpack.c.bf16 %v1702, %v1701
    %v1704 = vld [vmem:[#allocation12] sm:$0xf]
    %v1705 = vld [vmem:[#allocation12 + $0x4] sm:$0xf]
    %v1706 = vld [vmem:[#allocation12 + $0x8] sm:$0xf]
    %v1707 = vld [vmem:[#allocation12 + $0xc] sm:$0xf]
    %v1708 = vld [vmem:[#allocation12 + $0x10] sm:$0xf]
    %v1709 = vld [vmem:[#allocation12 + $0x14] sm:$0xf]
    %v1710 = vld [vmem:[#allocation12 + $0x18] sm:$0xf]
    %v1711 = vld [vmem:[#allocation12 + $0x1c] sm:$0xf]
    %v1712 = vld [vmem:[#allocation12 + $0x20] sm:$0xf]
    %v1713 = vld [vmem:[#allocation12 + $0x24] sm:$0xf]
    %v1714 = vld [vmem:[#allocation12 + $0x28] sm:$0xf]
    %v1715 = vld [vmem:[#allocation12 + $0x2c] sm:$0xf]
    %v1716 = vld [vmem:[#allocation12 + $0x30] sm:$0xf]
    %v1717 = vld [vmem:[#allocation12 + $0x34] sm:$0xf]
    %v1718 = vld [vmem:[#allocation12 + $0x38] sm:$0xf]
    %v1719 = vld [vmem:[#allocation12 + $0x3c] sm:$0xf]
    %v1720 = vld [vmem:[#allocation13] sm:$0x1]
    %v1722 = vlaneseq
    %v1723 = vshrl.u32 %v1722, 7
    %v1724 = vsub.s32 0, %v1723
    %v1725 = vrot.slane %v1720, %v1724
    %v1743 = vunpack.c.l.b16 %v1704
    %v1744 = vunpack.c.l.b16 %v1705
    %v1745 = vunpack.c.l.b16 %v1706
    %v1746 = vunpack.c.l.b16 %v1707
    %v1747 = vunpack.c.l.b16 %v1708
    %v1748 = vunpack.c.l.b16 %v1709
    %v1749 = vunpack.c.l.b16 %v1710
    %v1750 = vunpack.c.l.b16 %v1711
    %v1751 = vunpack.c.l.b16 %v1712
    %v1752 = vunpack.c.l.b16 %v1713
    %v1753 = vunpack.c.l.b16 %v1714
    %v1754 = vunpack.c.l.b16 %v1715
    %v1755 = vunpack.c.l.b16 %v1716
    %v1756 = vunpack.c.l.b16 %v1717
    %v1757 = vunpack.c.l.b16 %v1718
    %v1758 = vunpack.c.l.b16 %v1719
    %v1759 = vpack.c.b16 %v1744, %v1743
    %v1760 = vpack.c.b16 %v1746, %v1745
    %v1761 = vpack.c.b16 %v1748, %v1747
    %v1762 = vpack.c.b16 %v1750, %v1749
    %v1763 = vpack.c.b16 %v1752, %v1751
    %v1764 = vpack.c.b16 %v1754, %v1753
    %v1765 = vpack.c.b16 %v1756, %v1755
    %v1766 = vpack.c.b16 %v1758, %v1757
    %1775 = vmatprep.subr.bf16.mxu0 0
    %1776 = vmatpush1.bf16.msra.mxu0 %v1759
    %1777 = vmatprep.subr.bf16.mxu0 0
    %1778 = vmatpush1.bf16.msra.mxu0 %v1760
    %1779 = vmatprep.subr.bf16.mxu0 0
    %1780 = vmatpush1.bf16.msra.mxu0 %v1761
    %1781 = vmatprep.subr.bf16.mxu0 0
    %1782 = vmatpush1.bf16.msra.mxu0 %v1762
    %1783 = vmatprep.subr.bf16.mxu0 0
    %1784 = vmatpush1.bf16.msra.mxu0 %v1763
    %1785 = vmatprep.subr.bf16.mxu0 0
    %1786 = vmatpush1.bf16.msra.mxu0 %v1764
    %1787 = vmatprep.subr.bf16.mxu0 0
    %1788 = vmatpush1.bf16.msra.mxu0 %v1765
    %1789 = vmatprep.subr.bf16.mxu0 0
    %1790 = vmatpush1.bf16.msra.mxu0 %v1766
    %1791 = vmatprep.subr.bf16.mxu0 0
    %1792 = vmatpush1.bf16.msra.mxu0 0
    %1793 = vmatprep.subr.bf16.mxu0 0
    %1794 = vmatpush1.bf16.msra.mxu0 0
    %1795 = vmatprep.subr.bf16.mxu0 0
    %1796 = vmatpush1.bf16.msra.mxu0 0
    %1797 = vmatprep.subr.bf16.mxu0 0
    %1798 = vmatpush1.bf16.msra.mxu0 0
    %1799 = vmatprep.subr.bf16.mxu0 0
    %1800 = vmatpush1.bf16.msra.mxu0 0
    %1801 = vmatprep.subr.bf16.mxu0 0
    %1802 = vmatpush1.bf16.msra.mxu0 0
    %1803 = vmatprep.subr.bf16.mxu0 0
    %1804 = vmatpush1.bf16.msra.mxu0 0
    %1805 = vmatprep.subr.bf16.mxu0 0
    %1806 = vmatpush1.bf16.msra.mxu0 0
    %1807 = vmatprep.mubr.bf16.mxu0 0
    %1808 = vmatmul.mubr.bf16.gmra.mrb[0].mxu0 %v1703
    %v1809 = vpop.f32.mrb[0].mxu0
    %v1810 = vadd.f32 %v1725, %v1809
    %v1811 = vpop.f32.mrb[0].mxu0
    %v1812 = vpop.f32.mrb[0].mxu0
    %v1813 = vadd.f32 %v1725, %v1812
    %v1814 = vpop.f32.mrb[0].mxu0
    %1815 = vdwg.mxu0
    %1816 = vst [vmem:[%s13] sm:$0xff] %v1810
    %1817 = vst [vmem:[%s13 + $0x8] sm:$0xff] %v1813
    // Predicated region
    $region86: #{qnetwork_forward.1} parent=1 // pred_check
      _
    $region87: #{qnetwork_forward.1} parent=1 // pred_check_branch
      %1819 = sbr.rel (0) target = $region89
    $region88: #{qnetwork_forward.1} parent=1 // pred_region
      _
    $region89: #{qnetwork_forward.1} parent=1 // pred_fallthru
      _
    // Predicated region
    $region90: #{qnetwork_forward.1} parent=1 // pred_check
      _
    $region91: #{qnetwork_forward.1} parent=1 // pred_check_branch
      %1821 = sbr.rel (0) target = $region93
    $region92: #{qnetwork_forward.1} parent=1 // pred_region
      _
    $region93: #{qnetwork_forward.1} parent=1 // pred_fallthru
      _
    %1822 = vsyncpa [#allocation3], 1
    %1823 = vsyncpa [#allocation5], 1
    %1824 = vsyncpa [#allocation8], 1
    %1825 = vsyncpa [#allocation11], 1
    %1826 = vsyncpa [#allocation14], 1

</llo_original>
